<compile_context>
chip_gen: v5e
topology: v5e:2x2
jax: 0.10.0
libtpu: 0.0.40
codegen_flags: <defaults>
</compile_context>

<pallas_src>
import jax
import jax.numpy as jnp
from jax.experimental import pallas as pl
from jax.experimental.pallas import tpu as pltpu


def mlp_kernel(x_ref, w13_ref, w2_ref, o_ref, acc_ref):
    # x_ref  : (tm, E)     token tile, original dtype (same tile across all h)
    # w13_ref: (E, 2*th)   fused [gate | up] weight tile for hidden block h (bf16)
    # w2_ref : (th, E)     down-proj weight tile for hidden block h (bf16)
    # o_ref  : (tm, E)     output tile (resident across h; written on last step)
    # acc_ref: (tm, E)     f32 accumulator scratch
    h = pl.program_id(1)
    th = w2_ref.shape[0]

    @pl.when(h == 0)
    def _init():
        acc_ref[...] = jnp.zeros_like(acc_ref)

    # In-kernel cast to bf16 (VPU, hidden under MXU time).
    x = x_ref[...].astype(jnp.bfloat16)

    # Fused gate+up projection: one long MXU pass, f32 accumulation.
    gu = jnp.dot(x, w13_ref[...], preferred_element_type=jnp.float32)
    g = gu[:, :th]       # lane-aligned split (th % 128 == 0)
    u = gu[:, th:]

    # SwiGLU gating in f32 (sigmoid -> EUP); elementwise along H so H-tiling is exact.
    a = (g * jax.nn.sigmoid(g)) * u

    # Down projection tile, accumulate in f32.
    acc_ref[...] += jnp.dot(a.astype(jnp.bfloat16), w2_ref[...],
                            preferred_element_type=jnp.float32)

    @pl.when(h == pl.num_programs(1) - 1)
    def _finalize():
        o_ref[...] = acc_ref[...].astype(o_ref.dtype)


def prepare_weights(w1, w3, w2, *, th=512):
    """One-time weight preparation (do OUTSIDE the hot path).

    w1, w3: (E, H) gate/up projections, w2: (H, E) down projection
    (i.e. torch nn.Linear weights transposed).

    Returns:
      w13: (H//th, E, 2*th) bf16 -- per hidden tile h: [w1 tile | w3 tile]
      w2b: (H//th, th, E)   bf16
    """
    E, H = w1.shape
    th = min(th, H)
    assert H % th == 0 and th % 128 == 0, "hidden tile must divide H and be lane-aligned"
    nh = H // th
    w1b = w1.astype(jnp.bfloat16).reshape(E, nh, th)
    w3b = w3.astype(jnp.bfloat16).reshape(E, nh, th)
    # (nh, E, 2*th): each h-block is a contiguous slab [w1_tile_h | w3_tile_h].
    w13 = jnp.concatenate([w1b, w3b], axis=-1).transpose(1, 0, 2)
    w2b = w2.astype(jnp.bfloat16).reshape(nh, th, E)
    return w13, w2b


def mlp_pallas(x, w13, w2b, *, tm=512):
    """SwiGLU MLP forward.

    x  : (B, T, E) float32 (or bf16)
    w13: (H//th, E, 2*th) bf16  -- from prepare_weights
    w2b: (H//th, th, E)   bf16  -- from prepare_weights
    Returns (B, T, E) in x.dtype.
    """
    B, T, E = x.shape
    nh, e2, two_th = w13.shape
    th = two_th // 2
    H = nh * th
    assert e2 == E and w2b.shape == (nh, th, E), "weight shapes inconsistent with x"
    M = B * T

    tm = min(tm, M)
    assert M % tm == 0 and tm % 8 == 0, "token tile must divide M and be a multiple of 8"
    assert E % 128 == 0 and th % 128 == 0, "E and th must be lane-aligned"

    out_dtype = x.dtype
    x2d = x.reshape(M, E)           # no dtype conversion here

    grid = (M // tm, nh)

    # Bytes: x read once per m-tile, weights re-streamed once per m-tile, out written once.
    cost = pl.CostEstimate(
        flops=6 * M * E * H,                 # fused gate/up (4*M*E*H) + down (2*M*E*H)
        transcendentals=M * H,               # sigmoid
        bytes_accessed=(M * E * x.dtype.itemsize
                        + grid[0] * 3 * E * H * 2
                        + M * E * jnp.dtype(out_dtype).itemsize),
    )

    out2d = pl.pallas_call(
        mlp_kernel,
        out_shape=jax.ShapeDtypeStruct((M, E), out_dtype),
        grid_spec=pltpu.PrefetchScalarGridSpec(
            num_scalar_prefetch=0,
            grid=grid,
            in_specs=[
                pl.BlockSpec((tm, E), lambda i, h: (i, 0)),            # x tile (fixed over h)
                pl.BlockSpec((None, E, 2 * th), lambda i, h: (h, 0, 0)),  # fused w1|w3 h-tile
                pl.BlockSpec((None, th, E), lambda i, h: (h, 0, 0)),      # w2 h-tile
            ],
            out_specs=pl.BlockSpec((tm, E), lambda i, h: (i, 0)),      # resident over h
            scratch_shapes=[pltpu.VMEM((tm, E), jnp.float32)],
        ),
        compiler_params=pltpu.CompilerParams(
            dimension_semantics=("parallel", "arbitrary"),
            vmem_limit_bytes=48 * 1024 * 1024,   # fits v7x's 64 MiB VMEM with headroom
        ),
        cost_estimate=cost,
    )(x2d, w13, w2b)

    return out2d.reshape(B, T, E)


def mlp_reference(x, w1, w3, w2):
    """Pure-JAX reference mirroring the kernel's bf16-input / f32-accumulate numerics."""
    B, T, E = x.shape
    f32 = jnp.float32
    hp = jax.lax.Precision.HIGHEST
    xb = x.reshape(B * T, E).astype(jnp.bfloat16).astype(f32)
    w1b = w1.astype(jnp.bfloat16).astype(f32)
    w3b = w3.astype(jnp.bfloat16).astype(f32)
    w2b = w2.astype(jnp.bfloat16).astype(f32)
    g = jnp.dot(xb, w1b, precision=hp)
    u = jnp.dot(xb, w3b, precision=hp)
    a = ((g * jax.nn.sigmoid(g)) * u).astype(jnp.bfloat16).astype(f32)
    out = jnp.dot(a, w2b, precision=hp)
    return out.reshape(B, T, E).astype(x.dtype)


if __name__ == "__main__":
    # Small, MXU/lane-friendly shapes consistent with the module structure
    # (scaled-down n_embed / mlp_hidden_dim).
    B, T = 2, 128        # batch, sequence  -> M = 256 tokens
    E, H = 256, 512      # n_embed, mlp_hidden_dim (scaled down)

    key = jax.random.PRNGKey(0)
    kx, k1, k2, k3 = jax.random.split(key, 4)

    x = jax.random.normal(kx, (B, T, E), dtype=jnp.float32)
    # Deterministic init mimicking nn.Linear scale (1/sqrt(fan_in)).
    w1 = jax.random.uniform(k1, (E, H), jnp.float32, minval=-1.0, maxval=1.0) / jnp.sqrt(E)
    w3 = jax.random.uniform(k3, (E, H), jnp.float32, minval=-1.0, maxval=1.0) / jnp.sqrt(E)
    w2 = jax.random.uniform(k2, (H, E), jnp.float32, minval=-1.0, maxval=1.0) / jnp.sqrt(H)

    # One-time weight prep: bf16 cast + gate/up fusion + contiguous h-tiles.
    w13, w2b = prepare_weights(w1, w3, w2, th=256)

    # Multi-step grid on both axes: 2 token tiles (even -> both v7x TCs), 2 hidden tiles.
    out = jax.block_until_ready(mlp_pallas(x, w13, w2b, tm=128))

    ref = mlp_reference(x, w1, w3, w2)
    assert out.shape == (B, T, E)
    assert jnp.allclose(out, ref, atol=1e-2, rtol=1e-2), "mismatch vs reference"

    print("KERNEL_OK")
</pallas_src>

<mosaic_0001>
module attributes {stable_mosaic.version = 11 : i64} {
  func.func @mlp_kernel(%arg0: i32, %arg1: i32, %arg2: memref<128x256xf32, #tpu.memory_space<vmem>>, %arg3: memref<1x256x512xbf16, #tpu.memory_space<vmem>>, %arg4: memref<1x256x256xbf16, #tpu.memory_space<vmem>>, %arg5: memref<128x256xf32, #tpu.memory_space<vmem>>, %arg6: memref<128x256xf32, #tpu.memory_space<vmem>>) attributes {dimension_semantics = [#tpu.dimension_semantics<parallel>, #tpu.dimension_semantics<arbitrary>], iteration_bounds = array<i64: 2, 2>, scalar_prefetch = 0 : i64, scratch_operands = 1 : i64, tpu.core_type = #tpu.core_type<tc>, window_params = [{transform_indices = @transform_0, window_bounds = array<i64: 128, 256>}, {transform_indices = @transform_1, window_bounds = array<i64: 1, 256, 512>}, {transform_indices = @transform_2, window_bounds = array<i64: 1, 256, 256>}, {transform_indices = @transform_3, window_bounds = array<i64: 128, 256>}]} {
    %c0_i32 = arith.constant 0 : i32
    %0 = arith.cmpi eq, %arg1, %c0_i32 : i32
    %1 = arith.extui %0 : i1 to i32
    %c0_i32_0 = arith.constant 0 : i32
    %2 = arith.cmpi ne, %1, %c0_i32_0 : i32
    scf.if %2 {
      %cst_15 = arith.constant 0.000000e+00 : f32
      %27 = vector.broadcast %cst_15 : f32 to vector<128x256xf32>
      %c0_16 = arith.constant 0 : index
      %c0_17 = arith.constant 0 : index
      %28 = vector.load %arg6[%c0_16, %c0_17] : memref<128x256xf32, #tpu.memory_space<vmem>>, vector<128x256xf32>
      tpu.vector_store %arg6[%c0_16, %c0_17], %27 {strides = array<i32>} : memref<128x256xf32, #tpu.memory_space<vmem>>, vector<128x256xf32>,
    } else {
    }
    %c0 = arith.constant 0 : index
    %c0_1 = arith.constant 0 : index
    %3 = vector.load %arg2[%c0, %c0_1] : memref<128x256xf32, #tpu.memory_space<vmem>>, vector<128x256xf32>
    %4 = arith.truncf %3 : vector<128x256xf32> to vector<128x256xbf16>
    %c0_2 = arith.constant 0 : index
    %c0_3 = arith.constant 0 : index
    %c0_4 = arith.constant 0 : index
    %5 = vector.load %arg3[%c0_2, %c0_3, %c0_4] : memref<1x256x512xbf16, #tpu.memory_space<vmem>>, vector<1x256x512xbf16>
    %6 = vector.shape_cast %5 : vector<1x256x512xbf16> to vector<256x512xbf16>
    %cst = arith.constant dense<0.000000e+00> : vector<128x512xf32>
    %7 = tpu.matmul %4, %6, %cst {dimension_numbers = #tpu.dot_dimension_numbers<[1], [0], [0], [1], [0, 0, 1, 1], [], []>} : vector<128x256xbf16>, vector<256x512xbf16>, vector<128x512xf32> -> vector<128x512xf32>
    %8 = vector.extract_strided_slice %7 {offsets = [0, 0], sizes = [128, 256], strides = [1, 1]} : vector<128x512xf32> to vector<128x256xf32>
    %9 = vector.extract_strided_slice %7 {offsets = [0, 256], sizes = [128, 256], strides = [1, 1]} : vector<128x512xf32> to vector<128x256xf32>
    %10 = arith.negf %8 : vector<128x256xf32>
    %11 = math.exp %10 : vector<128x256xf32>
    %cst_5 = arith.constant 1.000000e+00 : f32
    %12 = vector.broadcast %cst_5 : f32 to vector<128x256xf32>
    %13 = arith.addf %12, %11 : vector<128x256xf32>
    %14 = arith.divf %12, %13 : vector<128x256xf32>
    %15 = arith.mulf %8, %14 : vector<128x256xf32>
    %16 = arith.mulf %15, %9 : vector<128x256xf32>
    %c0_6 = arith.constant 0 : index
    %c0_7 = arith.constant 0 : index
    %17 = vector.load %arg6[%c0_6, %c0_7] : memref<128x256xf32, #tpu.memory_space<vmem>>, vector<128x256xf32>
    %18 = arith.truncf %16 : vector<128x256xf32> to vector<128x256xbf16>
    %c0_8 = arith.constant 0 : index
    %c0_9 = arith.constant 0 : index
    %c0_10 = arith.constant 0 : index
    %19 = vector.load %arg4[%c0_8, %c0_9, %c0_10] : memref<1x256x256xbf16, #tpu.memory_space<vmem>>, vector<1x256x256xbf16>
    %20 = vector.shape_cast %19 : vector<1x256x256xbf16> to vector<256x256xbf16>
    %cst_11 = arith.constant dense<0.000000e+00> : vector<128x256xf32>
    %21 = tpu.matmul %18, %20, %cst_11 {dimension_numbers = #tpu.dot_dimension_numbers<[1], [0], [0], [1], [0, 0, 1, 1], [], []>} : vector<128x256xbf16>, vector<256x256xbf16>, vector<128x256xf32> -> vector<128x256xf32>
    %22 = arith.addf %17, %21 : vector<128x256xf32>
    %c0_12 = arith.constant 0 : index
    %c0_13 = arith.constant 0 : index
    %23 = vector.load %arg6[%c0_12, %c0_13] : memref<128x256xf32, #tpu.memory_space<vmem>>, vector<128x256xf32>
    tpu.vector_store %arg6[%c0_12, %c0_13], %22 {strides = array<i32>} : memref<128x256xf32, #tpu.memory_space<vmem>>, vector<128x256xf32>,
    %c1_i32 = arith.constant 1 : i32
    %24 = arith.cmpi eq, %arg1, %c1_i32 : i32
    %25 = arith.extui %24 : i1 to i32
    %c0_i32_14 = arith.constant 0 : i32
    %26 = arith.cmpi ne, %25, %c0_i32_14 : i32
    scf.if %26 {
      %c0_15 = arith.constant 0 : index
      %c0_16 = arith.constant 0 : index
      %27 = vector.load %arg6[%c0_15, %c0_16] : memref<128x256xf32, #tpu.memory_space<vmem>>, vector<128x256xf32>
      %c0_17 = arith.constant 0 : index
      %c0_18 = arith.constant 0 : index
      %28 = vector.load %arg5[%c0_17, %c0_18] : memref<128x256xf32, #tpu.memory_space<vmem>>, vector<128x256xf32>
      tpu.vector_store %arg5[%c0_17, %c0_18], %27 {strides = array<i32>} : memref<128x256xf32, #tpu.memory_space<vmem>>, vector<128x256xf32>,
    } else {
    }
    return
  }
  func.func @transform_0(%arg0: i32, %arg1: i32) -> (i32, i32) {
    %c0_i32 = arith.constant 0 : i32
    %c0_i32_0 = arith.constant 0 : i32
    return %arg0, %c0_i32 : i32, i32
  }
  func.func @transform_1(%arg0: i32, %arg1: i32) -> (i32, i32, i32) {
    %c0_i32 = arith.constant 0 : i32
    %c0_i32_0 = arith.constant 0 : i32
    %c0_i32_1 = arith.constant 0 : i32
    return %arg1, %c0_i32, %c0_i32_0 : i32, i32, i32
  }
  func.func @transform_2(%arg0: i32, %arg1: i32) -> (i32, i32, i32) {
    %c0_i32 = arith.constant 0 : i32
    %c0_i32_0 = arith.constant 0 : i32
    %c0_i32_1 = arith.constant 0 : i32
    return %arg1, %c0_i32, %c0_i32_0 : i32, i32, i32
  }
  func.func @transform_3(%arg0: i32, %arg1: i32) -> (i32, i32) {
    %c0_i32 = arith.constant 0 : i32
    %c0_i32_0 = arith.constant 0 : i32
    return %arg0, %c0_i32 : i32, i32
  }
}

</mosaic_0001>

<llo_original>
// kernel: tpu_custom_call.1
$region0: #{tpu_custom_call.1}
  #allocation0 [shape = 'u32[]', space=smem, size = 0x4, offset = 0x4, fixed_abs, tag = 'smem constant byte address 0x4 - core index']
  #allocation1 [shape = 'u32[72,128]{1,0:T(1,128)}', space=vmem, size = 0x9000, scoped, tag = 'internal scratch']
  #allocation2 [shape = 'f32[128,256]{1,0:T(8,128)}', space=vmem, size = 0x20000, scoped, tag = 'scratch operand']
  %s0 = inlined_call_operand.hbm [shape: f32[256,256], index: 0, kind: input, shape index: {}]
  %s1 = inlined_call_operand.hbm [shape: bf16[2,256,512], index: 1, kind: input, shape index: {}]
  %s2 = inlined_call_operand.hbm [shape: bf16[2,256,256], index: 2, kind: input, shape index: {}]
  %s3 = inlined_call_operand.hbm [shape: f32[256,256], index: 3, kind: output, shape index: {}]
  %s4 = sld [smem:[#allocation0]]
  $region65: #{tpu_custom_call.1} parent=0
    _
  %s6 = ssub.s32 1, %s4
  %s7 = scalar_select 0, %s6, %s4
  $region1: #{tpu_custom_call.1} parent=0
    #allocation3 [shape = 'u8[262144]{0}', space=vmem, size = 0x40000, scoped, tag = 'input window, operand 0']
    #allocation4 [shape = 's32[2]{0}', space=sflag, size = 0x8, scoped, tag = 'scoped memory for tpu_custom_call.1']
    #allocation5 [shape = 's32[2]{0}', space=sflag, size = 0x8, scoped, tag = 'scoped memory for tpu_custom_call.1']
    #allocation6 [shape = 'u8[524288]{0}', space=vmem, size = 0x80000, scoped, tag = 'input window, operand 1']
    #allocation7 [shape = 's32[2]{0}', space=sflag, size = 0x8, scoped, tag = 'scoped memory for tpu_custom_call.1']
    #allocation8 [shape = 'u8[262144]{0}', space=vmem, size = 0x40000, scoped, tag = 'input window, operand 2']
    #allocation9 [shape = 'u8[262144]{0}', space=vmem, size = 0x40000, scoped, tag = 'output window, operand 0']
    %8 = vsyncpa [#allocation4], 0
    %s9 = scalar_lea.sflag [#allocation4], 1
    %10 = vsyncpa %s9, 0
    %11 = vsyncpa [#allocation7], 0
    %s12 = scalar_lea.sflag [#allocation7], 1
    %13 = vsyncpa %s12, 0
    %14 = vsyncpa [#allocation5], 0
    %s15 = scalar_lea.sflag [#allocation5], 1
    %16 = vsyncpa %s15, 0
    loop: start=0, step=1, limit=6
    $region2: #{tpu_custom_call.1} parent=1 // loop_pre_header
      _
    $region3: #{tpu_custom_call.1} parent=1 // loop_header
      %s18 = sphi 0, %s22
      %p19 = scmp.ge.s32.totalorder %s18, 6
      %s25 = sphi 0, %s37
      %s26 = sphi 0, %s33
      %s27 = sphi 0, %s25
      %s28 = sphi 0, %s26
      %s29 = sphi 0, %s27
      %s30 = sphi 0, %s28
      %s40 = sphi 0, %s42
      %s43 = sphi 0, %s40
      %s44 = sphi 0, %s43
      %s60 = sphi 0, %s44
      %s66 = sphi 0, %s68
      %s69 = sphi 0, %s66
      %s70 = sphi 0, %s69
      %s86 = sphi 0, %s70
      %s92 = sphi 0, %s94
      %s95 = sphi 0, %s92
      %s96 = sphi 0, %s95
      %s112 = sphi 0, %s96
      %s118 = sphi 0, %s120
      %s121 = sphi 0, %s118
      %s122 = sphi 0, %s121
      %s138 = sphi 0, %s122
    $region4: #{tpu_custom_call.1} parent=1 // loop_header_branch
      %21 = sbr.rel (%p19) target = $region8
    $region5: #{tpu_custom_call.1} parent=1 // loop_body
      %s23 = ssub.s32 %s18, 1
      %s24 = ssub.s32 %s18, 2
      %s31 = sadd.s32 1, %s26
      %p32 = scmp.ge.s32.totalorder %s31, 2
      %s33 = scalar_select %p32, 0, %s31
      %s34 = sadd.s32 1, %s25
      %s35 = scalar_select %p32, %s34, %s25
      %p36 = scmp.ge.s32.totalorder %s35, 2
      %s37 = scalar_select %p36, 0, %s35
      %s38 = ssub.s32 %s25, %s37
      %p39 = scmp.eq.s32.totalorder %s38, 0
      %s41 = sadd.s32 %s40, 1
      %s42 = scalar_select %p39, %s40, %s41
      %p45 = pneg %p39
      %p46 = scmp.eq.s32.totalorder %s18, 3
      %p47 = por %p45, %p46
      %p48 = scmp.ne.s32.totalorder %s40, %s43
      %p49 = scmp.eq.s32.totalorder %s18, 0
      %p50 = por %p48, %p49
      %p51 = scmp.ne.s32.totalorder %s40, %s43
      %p52 = scmp.eq.s32.totalorder %s23, 3
      %p53 = por %p51, %p52
      %p54 = scmp.ne.s32.totalorder %s43, %s44
      %p55 = scmp.eq.s32.totalorder %s23, 0
      %p56 = por %p54, %p55
      %p57 = scmp.ne.s32.totalorder %s43, %s44
      %p58 = scmp.eq.s32.totalorder %s24, 3
      %p59 = por %p57, %p58
      %p61 = scmp.ne.s32.totalorder %s44, %s60
      %p62 = scmp.eq.s32.totalorder %s24, 0
      %p63 = por %p61, %p62
      %s64 = ssub.s32 %s26, %s33
      %p65 = scmp.eq.s32.totalorder %s64, 0
      %s67 = sadd.s32 %s66, 1
      %s68 = scalar_select %p65, %s66, %s67
      %p71 = pneg %p65
      %p72 = scmp.eq.s32.totalorder %s18, 3
      %p73 = por %p71, %p72
      %p74 = scmp.ne.s32.totalorder %s66, %s69
      %p75 = scmp.eq.s32.totalorder %s18, 0
      %p76 = por %p74, %p75
      %p77 = scmp.ne.s32.totalorder %s66, %s69
      %p78 = scmp.eq.s32.totalorder %s23, 3
      %p79 = por %p77, %p78
      %p80 = scmp.ne.s32.totalorder %s69, %s70
      %p81 = scmp.eq.s32.totalorder %s23, 0
      %p82 = por %p80, %p81
      %p83 = scmp.ne.s32.totalorder %s69, %s70
      %p84 = scmp.eq.s32.totalorder %s24, 3
      %p85 = por %p83, %p84
      %p87 = scmp.ne.s32.totalorder %s70, %s86
      %p88 = scmp.eq.s32.totalorder %s24, 0
      %p89 = por %p87, %p88
      %s90 = ssub.s32 %s26, %s33
      %p91 = scmp.eq.s32.totalorder %s90, 0
      %s93 = sadd.s32 %s92, 1
      %s94 = scalar_select %p91, %s92, %s93
      %p97 = pneg %p91
      %p98 = scmp.eq.s32.totalorder %s18, 3
      %p99 = por %p97, %p98
      %p100 = scmp.ne.s32.totalorder %s92, %s95
      %p101 = scmp.eq.s32.totalorder %s18, 0
      %p102 = por %p100, %p101
      %p103 = scmp.ne.s32.totalorder %s92, %s95
      %p104 = scmp.eq.s32.totalorder %s23, 3
      %p105 = por %p103, %p104
      %p106 = scmp.ne.s32.totalorder %s95, %s96
      %p107 = scmp.eq.s32.totalorder %s23, 0
      %p108 = por %p106, %p107
      %p109 = scmp.ne.s32.totalorder %s95, %s96
      %p110 = scmp.eq.s32.totalorder %s24, 3
      %p111 = por %p109, %p110
      %p113 = scmp.ne.s32.totalorder %s96, %s112
      %p114 = scmp.eq.s32.totalorder %s24, 0
      %p115 = por %p113, %p114
      %s116 = ssub.s32 %s25, %s37
      %p117 = scmp.eq.s32.totalorder %s116, 0
      %s119 = sadd.s32 %s118, 1
      %s120 = scalar_select %p117, %s118, %s119
      %p123 = pneg %p117
      %p124 = scmp.eq.s32.totalorder %s18, 3
      %p125 = por %p123, %p124
      %p126 = scmp.ne.s32.totalorder %s118, %s121
      %p127 = scmp.eq.s32.totalorder %s18, 0
      %p128 = por %p126, %p127
      %p129 = scmp.ne.s32.totalorder %s118, %s121
      %p130 = scmp.eq.s32.totalorder %s23, 3
      %p131 = por %p129, %p130
      %p132 = scmp.ne.s32.totalorder %s121, %s122
      %p133 = scmp.eq.s32.totalorder %s23, 0
      %p134 = por %p132, %p133
      %p135 = scmp.ne.s32.totalorder %s121, %s122
      %p136 = scmp.eq.s32.totalorder %s24, 3
      %p137 = por %p135, %p136
      %p139 = scmp.ne.s32.totalorder %s122, %s138
      %p140 = scmp.eq.s32.totalorder %s24, 0
      %p141 = por %p139, %p140
      %p142 = scmp.le.s32.totalorder 1, %s18
      %p143 = scmp.lt.s32.totalorder %s18, 5
      %p144 = pnand %p142, %p143
      %p145 = pneg %p144
      // Predicated region
      $region9: #{tpu_custom_call.1} parent=5 // pred_check
        _
      $region10: #{tpu_custom_call.1} parent=5 // pred_check_branch
        %147 = sbr.rel (%p144) target = $region12
      $region11: #{tpu_custom_call.1} parent=5 // pred_region
        %s148 = ssub.s32 %s18, 1
      $region12: #{tpu_custom_call.1} parent=5 // pred_fallthru
        _
      %p149 = scmp.lt.s32.totalorder %s18, 4
      // Predicated region
      $region13: #{tpu_custom_call.1} parent=5 // pred_check
        %p150 = pneg %p149
      $region14: #{tpu_custom_call.1} parent=5 // pred_check_branch
        %152 = sbr.rel (%p150) target = $region16
      $region15: #{tpu_custom_call.1} parent=5 // pred_region
        // Predicated region
        $region17: #{tpu_custom_call.1} parent=15 // pred_check
          %p153 = pneg %p50
        $region18: #{tpu_custom_call.1} parent=15 // pred_check_branch
          %155 = sbr.rel (%p153) target = $region20
        $region19: #{tpu_custom_call.1} parent=15 // pred_region
          %s156 = sand.u32 %s40, 1
          %s157 = scalar_lea.sflag [#allocation4], %s156
          %s158 = sand.u32 %s40, 1
          %s159 = smul.addr %s158, 256
          %s160 = scalar_lea.vmem [#allocation3], %s159
          %s161 = smul.u32 16, %s25
          %163 = vsyncadd %s157, 0
          %s164 = smul.addr %s161, 2
          %s165 = smul.addr %s164, 8
          %s166 = scalar_lea.hbm %s0, %s165
          %s167 = sshll.u32 %s166, 4
          %s168 = int_to_ptr.hbm [resolvable:$true] %s167
          %s169 = sshll.u32 %s160, 4
          %s170 = int_to_ptr.vmem [resolvable:$true] %s169
          %175 = dma.hbm_to_vmem [thread:$0]  %s168, 4096, %s170, %s157, 256, 256, 16
        $region20: #{tpu_custom_call.1} parent=15 // pred_fallthru
          _
        // Predicated region
        $region21: #{tpu_custom_call.1} parent=15 // pred_check
          %p176 = pneg %p76
        $region22: #{tpu_custom_call.1} parent=15 // pred_check_branch
          %178 = sbr.rel (%p176) target = $region24
        $region23: #{tpu_custom_call.1} parent=15 // pred_region
          %s179 = sand.u32 %s18, 1
          %s180 = scalar_lea.sflag [#allocation7], %s179
          %s181 = sand.u32 %s66, 1
          %s182 = smul.addr %s181, 512
          %s183 = scalar_lea.vmem [#allocation6], %s182
          %185 = vsyncadd %s180, 0
          %s186 = smul.addr %s26, 128
          %s187 = smul.addr %s186, 4
          %s188 = scalar_lea.hbm %s1, %s187
          %s189 = sshll.u32 %s188, 4
          %s190 = int_to_ptr.hbm [resolvable:$true] %s189
          %s191 = sshll.u32 %s183, 4
          %s192 = int_to_ptr.vmem [resolvable:$true] %s191
          %197 = dma.hbm_to_vmem [thread:$0]  %s190, 8192, %s192, %s180, 256, 256, 16
        $region24: #{tpu_custom_call.1} parent=15 // pred_fallthru
          _
        // Predicated region
        $region25: #{tpu_custom_call.1} parent=15 // pred_check
          %p198 = pneg %p102
        $region26: #{tpu_custom_call.1} parent=15 // pred_check_branch
          %200 = sbr.rel (%p198) target = $region28
        $region27: #{tpu_custom_call.1} parent=15 // pred_region
          %s201 = sand.u32 %s18, 1
          %s202 = scalar_lea.sflag [#allocation7], %s201
          %s203 = sand.u32 %s92, 1
          %s204 = smul.addr %s203, 256
          %s205 = scalar_lea.vmem [#allocation8], %s204
          %207 = vsyncadd %s202, 0
          %s208 = smul.addr %s26, 64
          %s209 = smul.addr %s208, 4
          %s210 = scalar_lea.hbm %s2, %s209
          %s211 = sshll.u32 %s210, 4
          %s212 = int_to_ptr.hbm [resolvable:$true] %s211
          %s213 = sshll.u32 %s205, 4
          %s214 = int_to_ptr.vmem [resolvable:$true] %s213
          %219 = dma.hbm_to_vmem [thread:$0]  %s212, 4096, %s214, %s202, 128, 128, 8
        $region28: #{tpu_custom_call.1} parent=15 // pred_fallthru
          _
      $region16: #{tpu_custom_call.1} parent=5 // pred_fallthru
        _
      %p220 = scmp.le.s32.totalorder 1, %s18
      %p221 = scmp.lt.s32.totalorder %s18, 5
      %p222 = pnand %p220, %p221
      %p223 = pneg %p222
      // Predicated region
      $region29: #{tpu_custom_call.1} parent=5 // pred_check
        _
      $region30: #{tpu_custom_call.1} parent=5 // pred_check_branch
        %225 = sbr.rel (%p222) target = $region32
      $region31: #{tpu_custom_call.1} parent=5 // pred_region
        %s226 = ssub.s32 %s18, 1
        %s227 = sand.u32 %s43, 1
        %s228 = scalar_lea.sflag [#allocation4], %s227
        %s229 = sand.u32 %s43, 1
        %s230 = smul.addr %s229, 256
        %s231 = scalar_lea.vmem [#allocation3], %s230
        // Predicated region
        $region33: #{tpu_custom_call.1} parent=31 // pred_check
          %p232 = pneg %p56
        $region34: #{tpu_custom_call.1} parent=31 // pred_check_branch
          %234 = sbr.rel (%p232) target = $region36
        $region35: #{tpu_custom_call.1} parent=31 // pred_region
          %236 = dma.done %s228, 4096
        $region36: #{tpu_custom_call.1} parent=31 // pred_fallthru
          _
        %s237 = sand.u32 %s23, 1
        %s238 = scalar_lea.sflag [#allocation7], %s237
        %s239 = sand.u32 %s69, 1
        %s240 = smul.addr %s239, 512
        %s241 = scalar_lea.vmem [#allocation6], %s240
        // Predicated region
        $region37: #{tpu_custom_call.1} parent=31 // pred_check
          %p242 = pneg %p82
        $region38: #{tpu_custom_call.1} parent=31 // pred_check_branch
          %244 = sbr.rel (%p242) target = $region40
        $region39: #{tpu_custom_call.1} parent=31 // pred_region
          %246 = dma.done %s238, 8192
        $region40: #{tpu_custom_call.1} parent=31 // pred_fallthru
          _
        %s247 = sand.u32 %s23, 1
        %s248 = scalar_lea.sflag [#allocation7], %s247
        %s249 = sand.u32 %s95, 1
        %s250 = smul.addr %s249, 256
        %s251 = scalar_lea.vmem [#allocation8], %s250
        // Predicated region
        $region41: #{tpu_custom_call.1} parent=31 // pred_check
          %p252 = pneg %p108
        $region42: #{tpu_custom_call.1} parent=31 // pred_check_branch
          %254 = sbr.rel (%p252) target = $region44
        $region43: #{tpu_custom_call.1} parent=31 // pred_region
          %256 = dma.done %s248, 4096
        $region44: #{tpu_custom_call.1} parent=31 // pred_fallthru
          _
        %s257 = sand.u32 %s43, 1
        %s258 = scalar_lea.sflag [#allocation4], %s257
        %s259 = sand.u32 %s43, 1
        %s260 = smul.addr %s259, 256
        %s261 = scalar_lea.vmem [#allocation3], %s260
        %p262 = pneg %p56
        %p263 = pneg %p53
        %s264 = sand.u32 %s23, 1
        %s265 = scalar_lea.sflag [#allocation7], %s264
        %s266 = sand.u32 %s69, 1
        %s267 = smul.addr %s266, 512
        %s268 = scalar_lea.vmem [#allocation6], %s267
        %p269 = pneg %p82
        %p270 = pneg %p79
        %s271 = sand.u32 %s23, 1
        %s272 = scalar_lea.sflag [#allocation7], %s271
        %s273 = sand.u32 %s95, 1
        %s274 = smul.addr %s273, 256
        %s275 = scalar_lea.vmem [#allocation8], %s274
        %p276 = pneg %p108
        %p277 = pneg %p105
        %p278 = pneg %p134
        %p279 = pneg %p131
        %s280 = sand.u32 %s121, 1
        %s281 = scalar_lea.sflag [#allocation5], %s280
        %s282 = sand.u32 %s121, 1
        %s283 = smul.addr %s282, 256
        %s284 = scalar_lea.vmem [#allocation9], %s283
        %s285 = smul.u32 16, %s27
        %s286 = smul.u32 16, %s27
        %p287 = scmp.eq.s32.totalorder %s28, 0
        // Predicated region
        $region45: #{tpu_custom_call.1} parent=31 // pred_check
          %p288 = pneg %p287
        $region46: #{tpu_custom_call.1} parent=31 // pred_check_branch
          %290 = sbr.rel (%p288) target = $region48
        $region47: #{tpu_custom_call.1} parent=31 // pred_region
          %291 = vst [vmem:[#allocation2] sm:$0xff] 0.0
          %292 = vst [vmem:[#allocation2 + $0x8] sm:$0xff] 0.0
          %293 = vst [vmem:[#allocation2 + $0x10] sm:$0xff] 0.0
          %294 = vst [vmem:[#allocation2 + $0x18] sm:$0xff] 0.0
          %295 = vst [vmem:[#allocation2 + $0x20] sm:$0xff] 0.0
          %296 = vst [vmem:[#allocation2 + $0x28] sm:$0xff] 0.0
          %297 = vst [vmem:[#allocation2 + $0x30] sm:$0xff] 0.0
          %298 = vst [vmem:[#allocation2 + $0x38] sm:$0xff] 0.0
          %299 = vst [vmem:[#allocation2 + $0x40] sm:$0xff] 0.0
          %300 = vst [vmem:[#allocation2 + $0x48] sm:$0xff] 0.0
          %301 = vst [vmem:[#allocation2 + $0x50] sm:$0xff] 0.0
          %302 = vst [vmem:[#allocation2 + $0x58] sm:$0xff] 0.0
          %303 = vst [vmem:[#allocation2 + $0x60] sm:$0xff] 0.0
          %304 = vst [vmem:[#allocation2 + $0x68] sm:$0xff] 0.0
          %305 = vst [vmem:[#allocation2 + $0x70] sm:$0xff] 0.0
          %306 = vst [vmem:[#allocation2 + $0x78] sm:$0xff] 0.0
          %307 = vst [vmem:[#allocation2 + $0x80] sm:$0xff] 0.0
          %308 = vst [vmem:[#allocation2 + $0x88] sm:$0xff] 0.0
          %309 = vst [vmem:[#allocation2 + $0x90] sm:$0xff] 0.0
          %310 = vst [vmem:[#allocation2 + $0x98] sm:$0xff] 0.0
          %311 = vst [vmem:[#allocation2 + $0xa0] sm:$0xff] 0.0
          %312 = vst [vmem:[#allocation2 + $0xa8] sm:$0xff] 0.0
          %313 = vst [vmem:[#allocation2 + $0xb0] sm:$0xff] 0.0
          %314 = vst [vmem:[#allocation2 + $0xb8] sm:$0xff] 0.0
          %315 = vst [vmem:[#allocation2 + $0xc0] sm:$0xff] 0.0
          %316 = vst [vmem:[#allocation2 + $0xc8] sm:$0xff] 0.0
          %317 = vst [vmem:[#allocation2 + $0xd0] sm:$0xff] 0.0
          %318 = vst [vmem:[#allocation2 + $0xd8] sm:$0xff] 0.0
          %319 = vst [vmem:[#allocation2 + $0xe0] sm:$0xff] 0.0
          %320 = vst [vmem:[#allocation2 + $0xe8] sm:$0xff] 0.0
          %321 = vst [vmem:[#allocation2 + $0xf0] sm:$0xff] 0.0
          %322 = vst [vmem:[#allocation2 + $0xf8] sm:$0xff] 0.0
        $region48: #{tpu_custom_call.1} parent=31 // pred_fallthru
          _
        %v323 = vld [vmem:[%s231] sm:$0xff]
        %v324 = vld [vmem:[%s231 + $0x8] sm:$0xff]
        %v325 = vld [vmem:[%s231 + $0x10] sm:$0xff]
        %v326 = vld [vmem:[%s231 + $0x18] sm:$0xff]
        %v327 = vld [vmem:[%s231 + $0x20] sm:$0xff]
        %v328 = vld [vmem:[%s231 + $0x28] sm:$0xff]
        %v329 = vld [vmem:[%s231 + $0x30] sm:$0xff]
        %v330 = vld [vmem:[%s231 + $0x38] sm:$0xff]
        %v331 = vld [vmem:[%s231 + $0x40] sm:$0xff]
        %v332 = vld [vmem:[%s231 + $0x48] sm:$0xff]
        %v333 = vld [vmem:[%s231 + $0x50] sm:$0xff]
        %v334 = vld [vmem:[%s231 + $0x58] sm:$0xff]
        %v335 = vld [vmem:[%s231 + $0x60] sm:$0xff]
        %v336 = vld [vmem:[%s231 + $0x68] sm:$0xff]
        %v337 = vld [vmem:[%s231 + $0x70] sm:$0xff]
        %v338 = vld [vmem:[%s231 + $0x78] sm:$0xff]
        %v339 = vld [vmem:[%s231 + $0x80] sm:$0xff]
        %v340 = vld [vmem:[%s231 + $0x88] sm:$0xff]
        %v341 = vld [vmem:[%s231 + $0x90] sm:$0xff]
        %v342 = vld [vmem:[%s231 + $0x98] sm:$0xff]
        %v343 = vld [vmem:[%s231 + $0xa0] sm:$0xff]
        %v344 = vld [vmem:[%s231 + $0xa8] sm:$0xff]
        %v345 = vld [vmem:[%s231 + $0xb0] sm:$0xff]
        %v346 = vld [vmem:[%s231 + $0xb8] sm:$0xff]
        %v347 = vld [vmem:[%s231 + $0xc0] sm:$0xff]
        %v348 = vld [vmem:[%s231 + $0xc8] sm:$0xff]
        %v349 = vld [vmem:[%s231 + $0xd0] sm:$0xff]
        %v350 = vld [vmem:[%s231 + $0xd8] sm:$0xff]
        %v351 = vld [vmem:[%s231 + $0xe0] sm:$0xff]
        %v352 = vld [vmem:[%s231 + $0xe8] sm:$0xff]
        %v353 = vld [vmem:[%s231 + $0xf0] sm:$0xff]
        %v354 = vld [vmem:[%s231 + $0xf8] sm:$0xff]
        %v355 = vpack.c.bf16 %v325, %v323
        %v356 = vpack.c.bf16 %v326, %v324
        %v357 = vpack.c.bf16 %v329, %v327
        %v358 = vpack.c.bf16 %v330, %v328
        %v359 = vpack.c.bf16 %v333, %v331
        %v360 = vpack.c.bf16 %v334, %v332
        %v361 = vpack.c.bf16 %v337, %v335
        %v362 = vpack.c.bf16 %v338, %v336
        %v363 = vpack.c.bf16 %v341, %v339
        %v364 = vpack.c.bf16 %v342, %v340
        %v365 = vpack.c.bf16 %v345, %v343
        %v366 = vpack.c.bf16 %v346, %v344
        %v367 = vpack.c.bf16 %v349, %v347
        %v368 = vpack.c.bf16 %v350, %v348
        %v369 = vpack.c.bf16 %v353, %v351
        %v370 = vpack.c.bf16 %v354, %v352
        %v371 = vld [vmem:[%s241] sm:$0xff]
        %v372 = vld [vmem:[%s241 + $0x8] sm:$0xff]
        %v373 = vld [vmem:[%s241 + $0x10] sm:$0xff]
        %v374 = vld [vmem:[%s241 + $0x18] sm:$0xff]
        %v375 = vld [vmem:[%s241 + $0x20] sm:$0xff]
        %v376 = vld [vmem:[%s241 + $0x28] sm:$0xff]
        %v377 = vld [vmem:[%s241 + $0x30] sm:$0xff]
        %v378 = vld [vmem:[%s241 + $0x38] sm:$0xff]
        %v379 = vld [vmem:[%s241 + $0x40] sm:$0xff]
        %v380 = vld [vmem:[%s241 + $0x48] sm:$0xff]
        %v381 = vld [vmem:[%s241 + $0x50] sm:$0xff]
        %v382 = vld [vmem:[%s241 + $0x58] sm:$0xff]
        %v383 = vld [vmem:[%s241 + $0x60] sm:$0xff]
        %v384 = vld [vmem:[%s241 + $0x68] sm:$0xff]
        %v385 = vld [vmem:[%s241 + $0x70] sm:$0xff]
        %v386 = vld [vmem:[%s241 + $0x78] sm:$0xff]
        %v387 = vld [vmem:[%s241 + $0x80] sm:$0xff]
        %v388 = vld [vmem:[%s241 + $0x88] sm:$0xff]
        %v389 = vld [vmem:[%s241 + $0x90] sm:$0xff]
        %v390 = vld [vmem:[%s241 + $0x98] sm:$0xff]
        %v391 = vld [vmem:[%s241 + $0xa0] sm:$0xff]
        %v392 = vld [vmem:[%s241 + $0xa8] sm:$0xff]
        %v393 = vld [vmem:[%s241 + $0xb0] sm:$0xff]
        %v394 = vld [vmem:[%s241 + $0xb8] sm:$0xff]
        %v395 = vld [vmem:[%s241 + $0xc0] sm:$0xff]
        %v396 = vld [vmem:[%s241 + $0xc8] sm:$0xff]
        %v397 = vld [vmem:[%s241 + $0xd0] sm:$0xff]
        %v398 = vld [vmem:[%s241 + $0xd8] sm:$0xff]
        %v399 = vld [vmem:[%s241 + $0xe0] sm:$0xff]
        %v400 = vld [vmem:[%s241 + $0xe8] sm:$0xff]
        %v401 = vld [vmem:[%s241 + $0xf0] sm:$0xff]
        %v402 = vld [vmem:[%s241 + $0xf8] sm:$0xff]
        %v403 = vld [vmem:[%s241 + $0x100] sm:$0xff]
        %v404 = vld [vmem:[%s241 + $0x108] sm:$0xff]
        %v405 = vld [vmem:[%s241 + $0x110] sm:$0xff]
        %v406 = vld [vmem:[%s241 + $0x118] sm:$0xff]
        %v407 = vld [vmem:[%s241 + $0x120] sm:$0xff]
        %v408 = vld [vmem:[%s241 + $0x128] sm:$0xff]
        %v409 = vld [vmem:[%s241 + $0x130] sm:$0xff]
        %v410 = vld [vmem:[%s241 + $0x138] sm:$0xff]
        %v411 = vld [vmem:[%s241 + $0x140] sm:$0xff]
        %v412 = vld [vmem:[%s241 + $0x148] sm:$0xff]
        %v413 = vld [vmem:[%s241 + $0x150] sm:$0xff]
        %v414 = vld [vmem:[%s241 + $0x158] sm:$0xff]
        %v415 = vld [vmem:[%s241 + $0x160] sm:$0xff]
        %v416 = vld [vmem:[%s241 + $0x168] sm:$0xff]
        %v417 = vld [vmem:[%s241 + $0x170] sm:$0xff]
        %v418 = vld [vmem:[%s241 + $0x178] sm:$0xff]
        %v419 = vld [vmem:[%s241 + $0x180] sm:$0xff]
        %v420 = vld [vmem:[%s241 + $0x188] sm:$0xff]
        %v421 = vld [vmem:[%s241 + $0x190] sm:$0xff]
        %v422 = vld [vmem:[%s241 + $0x198] sm:$0xff]
        %v423 = vld [vmem:[%s241 + $0x1a0] sm:$0xff]
        %v424 = vld [vmem:[%s241 + $0x1a8] sm:$0xff]
        %v425 = vld [vmem:[%s241 + $0x1b0] sm:$0xff]
        %v426 = vld [vmem:[%s241 + $0x1b8] sm:$0xff]
        %v427 = vld [vmem:[%s241 + $0x1c0] sm:$0xff]
        %v428 = vld [vmem:[%s241 + $0x1c8] sm:$0xff]
        %v429 = vld [vmem:[%s241 + $0x1d0] sm:$0xff]
        %v430 = vld [vmem:[%s241 + $0x1d8] sm:$0xff]
        %v431 = vld [vmem:[%s241 + $0x1e0] sm:$0xff]
        %v432 = vld [vmem:[%s241 + $0x1e8] sm:$0xff]
        %v433 = vld [vmem:[%s241 + $0x1f0] sm:$0xff]
        %v434 = vld [vmem:[%s241 + $0x1f8] sm:$0xff]
        %v499 = vunpack.c.l.b16 %v371
        %v500 = vunpack.c.h.b16 %v371
        %v501 = vunpack.c.l.b16 %v372
        %v502 = vunpack.c.h.b16 %v372
        %v503 = vunpack.c.l.b16 %v373
        %v504 = vunpack.c.h.b16 %v373
        %v505 = vunpack.c.l.b16 %v374
        %v506 = vunpack.c.h.b16 %v374
        %v507 = vunpack.c.l.b16 %v375
        %v508 = vunpack.c.h.b16 %v375
        %v509 = vunpack.c.l.b16 %v376
        %v510 = vunpack.c.h.b16 %v376
        %v511 = vunpack.c.l.b16 %v377
        %v512 = vunpack.c.h.b16 %v377
        %v513 = vunpack.c.l.b16 %v378
        %v514 = vunpack.c.h.b16 %v378
        %v515 = vunpack.c.l.b16 %v379
        %v516 = vunpack.c.h.b16 %v379
        %v517 = vunpack.c.l.b16 %v380
        %v518 = vunpack.c.h.b16 %v380
        %v519 = vunpack.c.l.b16 %v381
        %v520 = vunpack.c.h.b16 %v381
        %v521 = vunpack.c.l.b16 %v382
        %v522 = vunpack.c.h.b16 %v382
        %v523 = vunpack.c.l.b16 %v383
        %v524 = vunpack.c.h.b16 %v383
        %v525 = vunpack.c.l.b16 %v384
        %v526 = vunpack.c.h.b16 %v384
        %v527 = vunpack.c.l.b16 %v385
        %v528 = vunpack.c.h.b16 %v385
        %v529 = vunpack.c.l.b16 %v386
        %v530 = vunpack.c.h.b16 %v386
        %v531 = vunpack.c.l.b16 %v387
        %v532 = vunpack.c.h.b16 %v387
        %v533 = vunpack.c.l.b16 %v388
        %v534 = vunpack.c.h.b16 %v388
        %v535 = vunpack.c.l.b16 %v389
        %v536 = vunpack.c.h.b16 %v389
        %v537 = vunpack.c.l.b16 %v390
        %v538 = vunpack.c.h.b16 %v390
        %v539 = vunpack.c.l.b16 %v391
        %v540 = vunpack.c.h.b16 %v391
        %v541 = vunpack.c.l.b16 %v392
        %v542 = vunpack.c.h.b16 %v392
        %v543 = vunpack.c.l.b16 %v393
        %v544 = vunpack.c.h.b16 %v393
        %v545 = vunpack.c.l.b16 %v394
        %v546 = vunpack.c.h.b16 %v394
        %v547 = vunpack.c.l.b16 %v395
        %v548 = vunpack.c.h.b16 %v395
        %v549 = vunpack.c.l.b16 %v396
        %v550 = vunpack.c.h.b16 %v396
        %v551 = vunpack.c.l.b16 %v397
        %v552 = vunpack.c.h.b16 %v397
        %v553 = vunpack.c.l.b16 %v398
        %v554 = vunpack.c.h.b16 %v398
        %v555 = vunpack.c.l.b16 %v399
        %v556 = vunpack.c.h.b16 %v399
        %v557 = vunpack.c.l.b16 %v400
        %v558 = vunpack.c.h.b16 %v400
        %v559 = vunpack.c.l.b16 %v401
        %v560 = vunpack.c.h.b16 %v401
        %v561 = vunpack.c.l.b16 %v402
        %v562 = vunpack.c.h.b16 %v402
        %v563 = vunpack.c.l.b16 %v403
        %v564 = vunpack.c.h.b16 %v403
        %v565 = vunpack.c.l.b16 %v404
        %v566 = vunpack.c.h.b16 %v404
        %v567 = vunpack.c.l.b16 %v405
        %v568 = vunpack.c.h.b16 %v405
        %v569 = vunpack.c.l.b16 %v406
        %v570 = vunpack.c.h.b16 %v406
        %v571 = vunpack.c.l.b16 %v407
        %v572 = vunpack.c.h.b16 %v407
        %v573 = vunpack.c.l.b16 %v408
        %v574 = vunpack.c.h.b16 %v408
        %v575 = vunpack.c.l.b16 %v409
        %v576 = vunpack.c.h.b16 %v409
        %v577 = vunpack.c.l.b16 %v410
        %v578 = vunpack.c.h.b16 %v410
        %v579 = vunpack.c.l.b16 %v411
        %v580 = vunpack.c.h.b16 %v411
        %v581 = vunpack.c.l.b16 %v412
        %v582 = vunpack.c.h.b16 %v412
        %v583 = vunpack.c.l.b16 %v413
        %v584 = vunpack.c.h.b16 %v413
        %v585 = vunpack.c.l.b16 %v414
        %v586 = vunpack.c.h.b16 %v414
        %v587 = vunpack.c.l.b16 %v415
        %v588 = vunpack.c.h.b16 %v415
        %v589 = vunpack.c.l.b16 %v416
        %v590 = vunpack.c.h.b16 %v416
        %v591 = vunpack.c.l.b16 %v417
        %v592 = vunpack.c.h.b16 %v417
        %v593 = vunpack.c.l.b16 %v418
        %v594 = vunpack.c.h.b16 %v418
        %v595 = vunpack.c.l.b16 %v419
        %v596 = vunpack.c.h.b16 %v419
        %v597 = vunpack.c.l.b16 %v420
        %v598 = vunpack.c.h.b16 %v420
        %v599 = vunpack.c.l.b16 %v421
        %v600 = vunpack.c.h.b16 %v421
        %v601 = vunpack.c.l.b16 %v422
        %v602 = vunpack.c.h.b16 %v422
        %v603 = vunpack.c.l.b16 %v423
        %v604 = vunpack.c.h.b16 %v423
        %v605 = vunpack.c.l.b16 %v424
        %v606 = vunpack.c.h.b16 %v424
        %v607 = vunpack.c.l.b16 %v425
        %v608 = vunpack.c.h.b16 %v425
        %v609 = vunpack.c.l.b16 %v426
        %v610 = vunpack.c.h.b16 %v426
        %v611 = vunpack.c.l.b16 %v427
        %v612 = vunpack.c.h.b16 %v427
        %v613 = vunpack.c.l.b16 %v428
        %v614 = vunpack.c.h.b16 %v428
        %v615 = vunpack.c.l.b16 %v429
        %v616 = vunpack.c.h.b16 %v429
        %v617 = vunpack.c.l.b16 %v430
        %v618 = vunpack.c.h.b16 %v430
        %v619 = vunpack.c.l.b16 %v431
        %v620 = vunpack.c.h.b16 %v431
        %v621 = vunpack.c.l.b16 %v432
        %v622 = vunpack.c.h.b16 %v432
        %v623 = vunpack.c.l.b16 %v433
        %v624 = vunpack.c.h.b16 %v433
        %v625 = vunpack.c.l.b16 %v434
        %v626 = vunpack.c.h.b16 %v434
        %v627 = vpack.c.b16 %v503, %v499
        %v628 = vpack.c.b16 %v504, %v500
        %v629 = vpack.c.b16 %v505, %v501
        %v630 = vpack.c.b16 %v506, %v502
        %v631 = vpack.c.b16 %v511, %v507
        %v632 = vpack.c.b16 %v512, %v508
        %v633 = vpack.c.b16 %v513, %v509
        %v634 = vpack.c.b16 %v514, %v510
        %v635 = vpack.c.b16 %v519, %v515
        %v636 = vpack.c.b16 %v520, %v516
        %v637 = vpack.c.b16 %v521, %v517
        %v638 = vpack.c.b16 %v522, %v518
        %v639 = vpack.c.b16 %v527, %v523
        %v640 = vpack.c.b16 %v528, %v524
        %v641 = vpack.c.b16 %v529, %v525
        %v642 = vpack.c.b16 %v530, %v526
        %v643 = vpack.c.b16 %v535, %v531
        %v644 = vpack.c.b16 %v536, %v532
        %v645 = vpack.c.b16 %v537, %v533
        %v646 = vpack.c.b16 %v538, %v534
        %v647 = vpack.c.b16 %v543, %v539
        %v648 = vpack.c.b16 %v544, %v540
        %v649 = vpack.c.b16 %v545, %v541
        %v650 = vpack.c.b16 %v546, %v542
        %v651 = vpack.c.b16 %v551, %v547
        %v652 = vpack.c.b16 %v552, %v548
        %v653 = vpack.c.b16 %v553, %v549
        %v654 = vpack.c.b16 %v554, %v550
        %v655 = vpack.c.b16 %v559, %v555
        %v656 = vpack.c.b16 %v560, %v556
        %v657 = vpack.c.b16 %v561, %v557
        %v658 = vpack.c.b16 %v562, %v558
        %v659 = vpack.c.b16 %v567, %v563
        %v660 = vpack.c.b16 %v568, %v564
        %v661 = vpack.c.b16 %v569, %v565
        %v662 = vpack.c.b16 %v570, %v566
        %v663 = vpack.c.b16 %v575, %v571
        %v664 = vpack.c.b16 %v576, %v572
        %v665 = vpack.c.b16 %v577, %v573
        %v666 = vpack.c.b16 %v578, %v574
        %v667 = vpack.c.b16 %v583, %v579
        %v668 = vpack.c.b16 %v584, %v580
        %v669 = vpack.c.b16 %v585, %v581
        %v670 = vpack.c.b16 %v586, %v582
        %v671 = vpack.c.b16 %v591, %v587
        %v672 = vpack.c.b16 %v592, %v588
        %v673 = vpack.c.b16 %v593, %v589
        %v674 = vpack.c.b16 %v594, %v590
        %v675 = vpack.c.b16 %v599, %v595
        %v676 = vpack.c.b16 %v600, %v596
        %v677 = vpack.c.b16 %v601, %v597
        %v678 = vpack.c.b16 %v602, %v598
        %v679 = vpack.c.b16 %v607, %v603
        %v680 = vpack.c.b16 %v608, %v604
        %v681 = vpack.c.b16 %v609, %v605
        %v682 = vpack.c.b16 %v610, %v606
        %v683 = vpack.c.b16 %v615, %v611
        %v684 = vpack.c.b16 %v616, %v612
        %v685 = vpack.c.b16 %v617, %v613
        %v686 = vpack.c.b16 %v618, %v614
        %v687 = vpack.c.b16 %v623, %v619
        %v688 = vpack.c.b16 %v624, %v620
        %v689 = vpack.c.b16 %v625, %v621
        %v690 = vpack.c.b16 %v626, %v622
        %755 = vmatpush.bf16.msra.mxu0 %v655
        %756 = vmatpush.bf16.msra.mxu0 %v651
        %757 = vmatpush.bf16.msra.mxu0 %v647
        %758 = vmatpush.bf16.msra.mxu0 %v643
        %759 = vmatpush.bf16.msra.mxu0 %v639
        %760 = vmatpush.bf16.msra.mxu0 %v635
        %761 = vmatpush.bf16.msra.mxu0 %v631
        %762 = vmatpush.bf16.msra.mxu0 %v627
        %763 = vmatmul.bf16.gmra.mxu0 %v355
        %v764 = vpop.f32.mrf.mxu0
        %v765 = vadd.f32 0.0, %v764
        %v766 = vpop.f32.mrf.mxu0
        %v767 = vadd.f32 0.0, %v766
        %768 = vmatmul.bf16.gmra.mxu0 %v357
        %v769 = vpop.f32.mrf.mxu0
        %v770 = vadd.f32 0.0, %v769
        %v771 = vpop.f32.mrf.mxu0
        %v772 = vadd.f32 0.0, %v771
        %773 = vmatmul.bf16.gmra.mxu0 %v359
        %v774 = vpop.f32.mrf.mxu0
        %v775 = vadd.f32 0.0, %v774
        %v776 = vpop.f32.mrf.mxu0
        %v777 = vadd.f32 0.0, %v776
        %778 = vmatmul.bf16.gmra.mxu0 %v361
        %v779 = vpop.f32.mrf.mxu0
        %v780 = vadd.f32 0.0, %v779
        %v781 = vpop.f32.mrf.mxu0
        %v782 = vadd.f32 0.0, %v781
        %783 = vmatmul.bf16.gmra.mxu0 %v363
        %v784 = vpop.f32.mrf.mxu0
        %v785 = vadd.f32 0.0, %v784
        %v786 = vpop.f32.mrf.mxu0
        %v787 = vadd.f32 0.0, %v786
        %788 = vmatmul.bf16.gmra.mxu0 %v365
        %v789 = vpop.f32.mrf.mxu0
        %v790 = vadd.f32 0.0, %v789
        %v791 = vpop.f32.mrf.mxu0
        %v792 = vadd.f32 0.0, %v791
        %793 = vmatmul.bf16.gmra.mxu0 %v367
        %v794 = vpop.f32.mrf.mxu0
        %v795 = vadd.f32 0.0, %v794
        %v796 = vpop.f32.mrf.mxu0
        %v797 = vadd.f32 0.0, %v796
        %798 = vmatmul.bf16.gmra.mxu0 %v369
        %v799 = vpop.f32.mrf.mxu0
        %v800 = vadd.f32 0.0, %v799
        %v801 = vpop.f32.mrf.mxu0
        %v802 = vadd.f32 0.0, %v801
        %803 = vdwg.mxu0
        %804 = vmatpush.bf16.msra.mxu0 %v687
        %805 = vmatpush.bf16.msra.mxu0 %v683
        %806 = vmatpush.bf16.msra.mxu0 %v679
        %807 = vmatpush.bf16.msra.mxu0 %v675
        %808 = vmatpush.bf16.msra.mxu0 %v671
        %809 = vmatpush.bf16.msra.mxu0 %v667
        %810 = vmatpush.bf16.msra.mxu0 %v663
        %811 = vmatpush.bf16.msra.mxu0 %v659
        %812 = vmatmul.bf16.gmra.mxu0 %v356
        %v813 = vpop.f32.mrf.mxu0
        %v814 = vadd.f32 %v765, %v813
        %v815 = vpop.f32.mrf.mxu0
        %v816 = vadd.f32 %v767, %v815
        %817 = vmatmul.bf16.gmra.mxu0 %v358
        %v818 = vpop.f32.mrf.mxu0
        %v819 = vadd.f32 %v770, %v818
        %v820 = vpop.f32.mrf.mxu0
        %v821 = vadd.f32 %v772, %v820
        %822 = vmatmul.bf16.gmra.mxu0 %v360
        %v823 = vpop.f32.mrf.mxu0
        %v824 = vadd.f32 %v775, %v823
        %v825 = vpop.f32.mrf.mxu0
        %v826 = vadd.f32 %v777, %v825
        %827 = vmatmul.bf16.gmra.mxu0 %v362
        %v828 = vpop.f32.mrf.mxu0
        %v829 = vadd.f32 %v780, %v828
        %v830 = vpop.f32.mrf.mxu0
        %v831 = vadd.f32 %v782, %v830
        %832 = vmatmul.bf16.gmra.mxu0 %v364
        %v833 = vpop.f32.mrf.mxu0
        %v834 = vadd.f32 %v785, %v833
        %v835 = vpop.f32.mrf.mxu0
        %v836 = vadd.f32 %v787, %v835
        %837 = vmatmul.bf16.gmra.mxu0 %v366
        %v838 = vpop.f32.mrf.mxu0
        %v839 = vadd.f32 %v790, %v838
        %v840 = vpop.f32.mrf.mxu0
        %v841 = vadd.f32 %v792, %v840
        %842 = vmatmul.bf16.gmra.mxu0 %v368
        %v843 = vpop.f32.mrf.mxu0
        %v844 = vadd.f32 %v795, %v843
        %v845 = vpop.f32.mrf.mxu0
        %v846 = vadd.f32 %v797, %v845
        %847 = vmatmul.bf16.gmra.mxu0 %v370
        %v848 = vpop.f32.mrf.mxu0
        %v849 = vadd.f32 %v800, %v848
        %v850 = vpop.f32.mrf.mxu0
        %v851 = vadd.f32 %v802, %v850
        %852 = vdwg.mxu0
        %853 = vmatpush.bf16.msra.mxu0 %v656
        %854 = vmatpush.bf16.msra.mxu0 %v652
        %855 = vmatpush.bf16.msra.mxu0 %v648
        %856 = vmatpush.bf16.msra.mxu0 %v644
        %857 = vmatpush.bf16.msra.mxu0 %v640
        %858 = vmatpush.bf16.msra.mxu0 %v636
        %859 = vmatpush.bf16.msra.mxu0 %v632
        %860 = vmatpush.bf16.msra.mxu0 %v628
        %861 = vmatmul.bf16.gmra.mxu0 %v355
        %v862 = vpop.f32.mrf.mxu0
        %v863 = vadd.f32 0.0, %v862
        %v864 = vpop.f32.mrf.mxu0
        %v865 = vadd.f32 0.0, %v864
        %866 = vmatmul.bf16.gmra.mxu0 %v357
        %v867 = vpop.f32.mrf.mxu0
        %v868 = vadd.f32 0.0, %v867
        %v869 = vpop.f32.mrf.mxu0
        %v870 = vadd.f32 0.0, %v869
        %871 = vmatmul.bf16.gmra.mxu0 %v359
        %v872 = vpop.f32.mrf.mxu0
        %v873 = vadd.f32 0.0, %v872
        %v874 = vpop.f32.mrf.mxu0
        %v875 = vadd.f32 0.0, %v874
        %876 = vmatmul.bf16.gmra.mxu0 %v361
        %v877 = vpop.f32.mrf.mxu0
        %v878 = vadd.f32 0.0, %v877
        %v879 = vpop.f32.mrf.mxu0
        %v880 = vadd.f32 0.0, %v879
        %881 = vmatmul.bf16.gmra.mxu0 %v363
        %v882 = vpop.f32.mrf.mxu0
        %v883 = vadd.f32 0.0, %v882
        %v884 = vpop.f32.mrf.mxu0
        %v885 = vadd.f32 0.0, %v884
        %886 = vmatmul.bf16.gmra.mxu0 %v365
        %v887 = vpop.f32.mrf.mxu0
        %v888 = vadd.f32 0.0, %v887
        %v889 = vpop.f32.mrf.mxu0
        %v890 = vadd.f32 0.0, %v889
        %891 = vmatmul.bf16.gmra.mxu0 %v367
        %v892 = vpop.f32.mrf.mxu0
        %v893 = vadd.f32 0.0, %v892
        %v894 = vpop.f32.mrf.mxu0
        %v895 = vadd.f32 0.0, %v894
        %896 = vmatmul.bf16.gmra.mxu0 %v369
        %v897 = vpop.f32.mrf.mxu0
        %v898 = vadd.f32 0.0, %v897
        %v899 = vpop.f32.mrf.mxu0
        %v900 = vadd.f32 0.0, %v899
        %901 = vdwg.mxu0
        %902 = vmatpush.bf16.msra.mxu0 %v688
        %903 = vmatpush.bf16.msra.mxu0 %v684
        %904 = vmatpush.bf16.msra.mxu0 %v680
        %905 = vmatpush.bf16.msra.mxu0 %v676
        %906 = vmatpush.bf16.msra.mxu0 %v672
        %907 = vmatpush.bf16.msra.mxu0 %v668
        %908 = vmatpush.bf16.msra.mxu0 %v664
        %909 = vmatpush.bf16.msra.mxu0 %v660
        %910 = vmatmul.bf16.gmra.mxu0 %v356
        %v911 = vpop.f32.mrf.mxu0
        %v912 = vadd.f32 %v863, %v911
        %v913 = vpop.f32.mrf.mxu0
        %v914 = vadd.f32 %v865, %v913
        %915 = vmatmul.bf16.gmra.mxu0 %v358
        %v916 = vpop.f32.mrf.mxu0
        %v917 = vadd.f32 %v868, %v916
        %v918 = vpop.f32.mrf.mxu0
        %v919 = vadd.f32 %v870, %v918
        %920 = vmatmul.bf16.gmra.mxu0 %v360
        %v921 = vpop.f32.mrf.mxu0
        %v922 = vadd.f32 %v873, %v921
        %v923 = vpop.f32.mrf.mxu0
        %v924 = vadd.f32 %v875, %v923
        %925 = vmatmul.bf16.gmra.mxu0 %v362
        %v926 = vpop.f32.mrf.mxu0
        %v927 = vadd.f32 %v878, %v926
        %v928 = vpop.f32.mrf.mxu0
        %v929 = vadd.f32 %v880, %v928
        %930 = vmatmul.bf16.gmra.mxu0 %v364
        %v931 = vpop.f32.mrf.mxu0
        %v932 = vadd.f32 %v883, %v931
        %v933 = vpop.f32.mrf.mxu0
        %v934 = vadd.f32 %v885, %v933
        %935 = vmatmul.bf16.gmra.mxu0 %v366
        %v936 = vpop.f32.mrf.mxu0
        %v937 = vadd.f32 %v888, %v936
        %v938 = vpop.f32.mrf.mxu0
        %v939 = vadd.f32 %v890, %v938
        %940 = vmatmul.bf16.gmra.mxu0 %v368
        %v941 = vpop.f32.mrf.mxu0
        %v942 = vadd.f32 %v893, %v941
        %v943 = vpop.f32.mrf.mxu0
        %v944 = vadd.f32 %v895, %v943
        %945 = vmatmul.bf16.gmra.mxu0 %v370
        %v946 = vpop.f32.mrf.mxu0
        %v947 = vadd.f32 %v898, %v946
        %v948 = vpop.f32.mrf.mxu0
        %v949 = vadd.f32 %v900, %v948
        %950 = vdwg.mxu0
        %951 = vmatpush.bf16.msra.mxu0 %v657
        %952 = vmatpush.bf16.msra.mxu0 %v653
        %953 = vmatpush.bf16.msra.mxu0 %v649
        %954 = vmatpush.bf16.msra.mxu0 %v645
        %955 = vmatpush.bf16.msra.mxu0 %v641
        %956 = vmatpush.bf16.msra.mxu0 %v637
        %957 = vmatpush.bf16.msra.mxu0 %v633
        %958 = vmatpush.bf16.msra.mxu0 %v629
        %959 = vmatmul.bf16.gmra.mxu0 %v355
        %v960 = vpop.f32.mrf.mxu0
        %v961 = vadd.f32 0.0, %v960
        %v962 = vpop.f32.mrf.mxu0
        %v963 = vadd.f32 0.0, %v962
        %964 = vmatmul.bf16.gmra.mxu0 %v357
        %v965 = vpop.f32.mrf.mxu0
        %v966 = vadd.f32 0.0, %v965
        %v967 = vpop.f32.mrf.mxu0
        %v968 = vadd.f32 0.0, %v967
        %969 = vmatmul.bf16.gmra.mxu0 %v359
        %v970 = vpop.f32.mrf.mxu0
        %v971 = vadd.f32 0.0, %v970
        %v972 = vpop.f32.mrf.mxu0
        %v973 = vadd.f32 0.0, %v972
        %974 = vmatmul.bf16.gmra.mxu0 %v361
        %v975 = vpop.f32.mrf.mxu0
        %v976 = vadd.f32 0.0, %v975
        %v977 = vpop.f32.mrf.mxu0
        %v978 = vadd.f32 0.0, %v977
        %979 = vmatmul.bf16.gmra.mxu0 %v363
        %v980 = vpop.f32.mrf.mxu0
        %v981 = vadd.f32 0.0, %v980
        %v982 = vpop.f32.mrf.mxu0
        %v983 = vadd.f32 0.0, %v982
        %984 = vmatmul.bf16.gmra.mxu0 %v365
        %v985 = vpop.f32.mrf.mxu0
        %v986 = vadd.f32 0.0, %v985
        %v987 = vpop.f32.mrf.mxu0
        %v988 = vadd.f32 0.0, %v987
        %989 = vmatmul.bf16.gmra.mxu0 %v367
        %v990 = vpop.f32.mrf.mxu0
        %v991 = vadd.f32 0.0, %v990
        %v992 = vpop.f32.mrf.mxu0
        %v993 = vadd.f32 0.0, %v992
        %994 = vmatmul.bf16.gmra.mxu0 %v369
        %v995 = vpop.f32.mrf.mxu0
        %v996 = vadd.f32 0.0, %v995
        %v997 = vpop.f32.mrf.mxu0
        %v998 = vadd.f32 0.0, %v997
        %999 = vdwg.mxu0
        %1000 = vmatpush.bf16.msra.mxu0 %v689
        %1001 = vmatpush.bf16.msra.mxu0 %v685
        %1002 = vmatpush.bf16.msra.mxu0 %v681
        %1003 = vmatpush.bf16.msra.mxu0 %v677
        %1004 = vmatpush.bf16.msra.mxu0 %v673
        %1005 = vmatpush.bf16.msra.mxu0 %v669
        %1006 = vmatpush.bf16.msra.mxu0 %v665
        %1007 = vmatpush.bf16.msra.mxu0 %v661
        %1008 = vmatmul.bf16.gmra.mxu0 %v356
        %v1009 = vpop.f32.mrf.mxu0
        %v1010 = vadd.f32 %v961, %v1009
        %v1011 = vpop.f32.mrf.mxu0
        %v1012 = vadd.f32 %v963, %v1011
        %1013 = vmatmul.bf16.gmra.mxu0 %v358
        %v1014 = vpop.f32.mrf.mxu0
        %v1015 = vadd.f32 %v966, %v1014
        %v1016 = vpop.f32.mrf.mxu0
        %v1017 = vadd.f32 %v968, %v1016
        %1018 = vmatmul.bf16.gmra.mxu0 %v360
        %v1019 = vpop.f32.mrf.mxu0
        %v1020 = vadd.f32 %v971, %v1019
        %v1021 = vpop.f32.mrf.mxu0
        %v1022 = vadd.f32 %v973, %v1021
        %1023 = vmatmul.bf16.gmra.mxu0 %v362
        %v1024 = vpop.f32.mrf.mxu0
        %v1025 = vadd.f32 %v976, %v1024
        %v1026 = vpop.f32.mrf.mxu0
        %v1027 = vadd.f32 %v978, %v1026
        %1028 = vmatmul.bf16.gmra.mxu0 %v364
        %v1029 = vpop.f32.mrf.mxu0
        %v1030 = vadd.f32 %v981, %v1029
        %v1031 = vpop.f32.mrf.mxu0
        %v1032 = vadd.f32 %v983, %v1031
        %1033 = vmatmul.bf16.gmra.mxu0 %v366
        %v1034 = vpop.f32.mrf.mxu0
        %v1035 = vadd.f32 %v986, %v1034
        %v1036 = vpop.f32.mrf.mxu0
        %v1037 = vadd.f32 %v988, %v1036
        %1038 = vmatmul.bf16.gmra.mxu0 %v368
        %v1039 = vpop.f32.mrf.mxu0
        %v1040 = vadd.f32 %v991, %v1039
        %v1041 = vpop.f32.mrf.mxu0
        %v1042 = vadd.f32 %v993, %v1041
        %1043 = vmatmul.bf16.gmra.mxu0 %v370
        %v1044 = vpop.f32.mrf.mxu0
        %v1045 = vadd.f32 %v996, %v1044
        %v1046 = vpop.f32.mrf.mxu0
        %v1047 = vadd.f32 %v998, %v1046
        %1048 = vdwg.mxu0
        %1049 = vmatpush.bf16.msra.mxu0 %v658
        %1050 = vmatpush.bf16.msra.mxu0 %v654
        %1051 = vmatpush.bf16.msra.mxu0 %v650
        %1052 = vmatpush.bf16.msra.mxu0 %v646
        %1053 = vmatpush.bf16.msra.mxu0 %v642
        %1054 = vmatpush.bf16.msra.mxu0 %v638
        %1055 = vmatpush.bf16.msra.mxu0 %v634
        %1056 = vmatpush.bf16.msra.mxu0 %v630
        %1057 = vmatmul.bf16.gmra.mxu0 %v355
        %v1058 = vpop.f32.mrf.mxu0
        %v1059 = vadd.f32 0.0, %v1058
        %v1060 = vpop.f32.mrf.mxu0
        %v1061 = vadd.f32 0.0, %v1060
        %1062 = vmatmul.bf16.gmra.mxu0 %v357
        %v1063 = vpop.f32.mrf.mxu0
        %v1064 = vadd.f32 0.0, %v1063
        %v1065 = vpop.f32.mrf.mxu0
        %v1066 = vadd.f32 0.0, %v1065
        %1067 = vmatmul.bf16.gmra.mxu0 %v359
        %v1068 = vpop.f32.mrf.mxu0
        %v1069 = vadd.f32 0.0, %v1068
        %v1070 = vpop.f32.mrf.mxu0
        %v1071 = vadd.f32 0.0, %v1070
        %1072 = vmatmul.bf16.gmra.mxu0 %v361
        %v1073 = vpop.f32.mrf.mxu0
        %v1074 = vadd.f32 0.0, %v1073
        %v1075 = vpop.f32.mrf.mxu0
        %v1076 = vadd.f32 0.0, %v1075
        %1077 = vmatmul.bf16.gmra.mxu0 %v363
        %v1078 = vpop.f32.mrf.mxu0
        %v1079 = vadd.f32 0.0, %v1078
        %v1080 = vpop.f32.mrf.mxu0
        %v1081 = vadd.f32 0.0, %v1080
        %1082 = vmatmul.bf16.gmra.mxu0 %v365
        %v1083 = vpop.f32.mrf.mxu0
        %v1084 = vadd.f32 0.0, %v1083
        %v1085 = vpop.f32.mrf.mxu0
        %v1086 = vadd.f32 0.0, %v1085
        %1087 = vmatmul.bf16.gmra.mxu0 %v367
        %v1088 = vpop.f32.mrf.mxu0
        %v1089 = vadd.f32 0.0, %v1088
        %v1090 = vpop.f32.mrf.mxu0
        %v1091 = vadd.f32 0.0, %v1090
        %1092 = vmatmul.bf16.gmra.mxu0 %v369
        %v1093 = vpop.f32.mrf.mxu0
        %v1094 = vadd.f32 0.0, %v1093
        %v1095 = vpop.f32.mrf.mxu0
        %v1096 = vadd.f32 0.0, %v1095
        %1097 = vdwg.mxu0
        %1098 = vmatpush.bf16.msra.mxu0 %v690
        %1099 = vmatpush.bf16.msra.mxu0 %v686
        %1100 = vmatpush.bf16.msra.mxu0 %v682
        %1101 = vmatpush.bf16.msra.mxu0 %v678
        %1102 = vmatpush.bf16.msra.mxu0 %v674
        %1103 = vmatpush.bf16.msra.mxu0 %v670
        %1104 = vmatpush.bf16.msra.mxu0 %v666
        %1105 = vmatpush.bf16.msra.mxu0 %v662
        %1106 = vmatmul.bf16.gmra.mxu0 %v356
        %v1107 = vpop.f32.mrf.mxu0
        %v1108 = vadd.f32 %v1059, %v1107
        %v1109 = vpop.f32.mrf.mxu0
        %v1110 = vadd.f32 %v1061, %v1109
        %1111 = vmatmul.bf16.gmra.mxu0 %v358
        %v1112 = vpop.f32.mrf.mxu0
        %v1113 = vadd.f32 %v1064, %v1112
        %v1114 = vpop.f32.mrf.mxu0
        %v1115 = vadd.f32 %v1066, %v1114
        %1116 = vmatmul.bf16.gmra.mxu0 %v360
        %v1117 = vpop.f32.mrf.mxu0
        %v1118 = vadd.f32 %v1069, %v1117
        %v1119 = vpop.f32.mrf.mxu0
        %v1120 = vadd.f32 %v1071, %v1119
        %1121 = vmatmul.bf16.gmra.mxu0 %v362
        %v1122 = vpop.f32.mrf.mxu0
        %v1123 = vadd.f32 %v1074, %v1122
        %v1124 = vpop.f32.mrf.mxu0
        %v1125 = vadd.f32 %v1076, %v1124
        %1126 = vmatmul.bf16.gmra.mxu0 %v364
        %v1127 = vpop.f32.mrf.mxu0
        %v1128 = vadd.f32 %v1079, %v1127
        %v1129 = vpop.f32.mrf.mxu0
        %v1130 = vadd.f32 %v1081, %v1129
        %1131 = vmatmul.bf16.gmra.mxu0 %v366
        %v1132 = vpop.f32.mrf.mxu0
        %v1133 = vadd.f32 %v1084, %v1132
        %v1134 = vpop.f32.mrf.mxu0
        %v1135 = vadd.f32 %v1086, %v1134
        %1136 = vmatmul.bf16.gmra.mxu0 %v368
        %v1137 = vpop.f32.mrf.mxu0
        %v1138 = vadd.f32 %v1089, %v1137
        %v1139 = vpop.f32.mrf.mxu0
        %v1140 = vadd.f32 %v1091, %v1139
        %1141 = vmatmul.bf16.gmra.mxu0 %v370
        %v1142 = vpop.f32.mrf.mxu0
        %v1143 = vadd.f32 %v1094, %v1142
        %v1144 = vpop.f32.mrf.mxu0
        %v1145 = vadd.f32 %v1096, %v1144
        %1146 = vdwg.mxu0
        %v1147 = vxor.u32 %v814, 2147483648
        %v1148 = vxor.u32 %v912, 2147483648
        %v1149 = vxor.u32 %v816, 2147483648
        %v1150 = vxor.u32 %v914, 2147483648
        %v1151 = vxor.u32 %v819, 2147483648
        %v1152 = vxor.u32 %v917, 2147483648
        %v1153 = vxor.u32 %v821, 2147483648
        %v1154 = vxor.u32 %v919, 2147483648
        %v1155 = vxor.u32 %v824, 2147483648
        %v1156 = vxor.u32 %v922, 2147483648
        %v1157 = vxor.u32 %v826, 2147483648
        %v1158 = vxor.u32 %v924, 2147483648
        %v1159 = vxor.u32 %v829, 2147483648
        %v1160 = vxor.u32 %v927, 2147483648
        %v1161 = vxor.u32 %v831, 2147483648
        %v1162 = vxor.u32 %v929, 2147483648
        %v1163 = vxor.u32 %v834, 2147483648
        %v1164 = vxor.u32 %v932, 2147483648
        %v1165 = vxor.u32 %v836, 2147483648
        %v1166 = vxor.u32 %v934, 2147483648
        %v1167 = vxor.u32 %v839, 2147483648
        %v1168 = vxor.u32 %v937, 2147483648
        %v1169 = vxor.u32 %v841, 2147483648
        %v1170 = vxor.u32 %v939, 2147483648
        %v1171 = vxor.u32 %v844, 2147483648
        %v1172 = vxor.u32 %v942, 2147483648
        %v1173 = vxor.u32 %v846, 2147483648
        %v1174 = vxor.u32 %v944, 2147483648
        %v1175 = vxor.u32 %v849, 2147483648
        %v1176 = vxor.u32 %v947, 2147483648
        %v1177 = vxor.u32 %v851, 2147483648
        %v1178 = vxor.u32 %v949, 2147483648
        %v1179 = vmul.f32 %v1147, 1.442695
        %v1180 = vpow.pop %v1179
        %v1181 = vmul.f32 %v1148, 1.442695
        %v1182 = vpow.pop %v1181
        %v1183 = vmul.f32 %v1149, 1.442695
        %v1184 = vpow.pop %v1183
        %v1185 = vmul.f32 %v1150, 1.442695
        %v1186 = vpow.pop %v1185
        %v1187 = vmul.f32 %v1151, 1.442695
        %v1188 = vpow.pop %v1187
        %v1189 = vmul.f32 %v1152, 1.442695
        %v1190 = vpow.pop %v1189
        %v1191 = vmul.f32 %v1153, 1.442695
        %v1192 = vpow.pop %v1191
        %v1193 = vmul.f32 %v1154, 1.442695
        %v1194 = vpow.pop %v1193
        %v1195 = vmul.f32 %v1155, 1.442695
        %v1196 = vpow.pop %v1195
        %v1197 = vmul.f32 %v1156, 1.442695
        %v1198 = vpow.pop %v1197
        %v1199 = vmul.f32 %v1157, 1.442695
        %v1200 = vpow.pop %v1199
        %v1201 = vmul.f32 %v1158, 1.442695
        %v1202 = vpow.pop %v1201
        %v1203 = vmul.f32 %v1159, 1.442695
        %v1204 = vpow.pop %v1203
        %v1205 = vmul.f32 %v1160, 1.442695
        %v1206 = vpow.pop %v1205
        %v1207 = vmul.f32 %v1161, 1.442695
        %v1208 = vpow.pop %v1207
        %v1209 = vmul.f32 %v1162, 1.442695
        %v1210 = vpow.pop %v1209
        %v1211 = vmul.f32 %v1163, 1.442695
        %v1212 = vpow.pop %v1211
        %v1213 = vmul.f32 %v1164, 1.442695
        %v1214 = vpow.pop %v1213
        %v1215 = vmul.f32 %v1165, 1.442695
        %v1216 = vpow.pop %v1215
        %v1217 = vmul.f32 %v1166, 1.442695
        %v1218 = vpow.pop %v1217
        %v1219 = vmul.f32 %v1167, 1.442695
        %v1220 = vpow.pop %v1219
        %v1221 = vmul.f32 %v1168, 1.442695
        %v1222 = vpow.pop %v1221
        %v1223 = vmul.f32 %v1169, 1.442695
        %v1224 = vpow.pop %v1223
        %v1225 = vmul.f32 %v1170, 1.442695
        %v1226 = vpow.pop %v1225
        %v1227 = vmul.f32 %v1171, 1.442695
        %v1228 = vpow.pop %v1227
        %v1229 = vmul.f32 %v1172, 1.442695
        %v1230 = vpow.pop %v1229
        %v1231 = vmul.f32 %v1173, 1.442695
        %v1232 = vpow.pop %v1231
        %v1233 = vmul.f32 %v1174, 1.442695
        %v1234 = vpow.pop %v1233
        %v1235 = vmul.f32 %v1175, 1.442695
        %v1236 = vpow.pop %v1235
        %v1237 = vmul.f32 %v1176, 1.442695
        %v1238 = vpow.pop %v1237
        %v1239 = vmul.f32 %v1177, 1.442695
        %v1240 = vpow.pop %v1239
        %v1241 = vmul.f32 %v1178, 1.442695
        %v1242 = vpow.pop %v1241
        %v1243 = vadd.f32 %v1180, 1.0
        %v1244 = vadd.f32 %v1182, 1.0
        %v1245 = vadd.f32 %v1184, 1.0
        %v1246 = vadd.f32 %v1186, 1.0
        %v1247 = vadd.f32 %v1188, 1.0
        %v1248 = vadd.f32 %v1190, 1.0
        %v1249 = vadd.f32 %v1192, 1.0
        %v1250 = vadd.f32 %v1194, 1.0
        %v1251 = vadd.f32 %v1196, 1.0
        %v1252 = vadd.f32 %v1198, 1.0
        %v1253 = vadd.f32 %v1200, 1.0
        %v1254 = vadd.f32 %v1202, 1.0
        %v1255 = vadd.f32 %v1204, 1.0
        %v1256 = vadd.f32 %v1206, 1.0
        %v1257 = vadd.f32 %v1208, 1.0
        %v1258 = vadd.f32 %v1210, 1.0
        %v1259 = vadd.f32 %v1212, 1.0
        %v1260 = vadd.f32 %v1214, 1.0
        %v1261 = vadd.f32 %v1216, 1.0
        %v1262 = vadd.f32 %v1218, 1.0
        %v1263 = vadd.f32 %v1220, 1.0
        %v1264 = vadd.f32 %v1222, 1.0
        %v1265 = vadd.f32 %v1224, 1.0
        %v1266 = vadd.f32 %v1226, 1.0
        %v1267 = vadd.f32 %v1228, 1.0
        %v1268 = vadd.f32 %v1230, 1.0
        %v1269 = vadd.f32 %v1232, 1.0
        %v1270 = vadd.f32 %v1234, 1.0
        %v1271 = vadd.f32 %v1236, 1.0
        %v1272 = vadd.f32 %v1238, 1.0
        %v1273 = vadd.f32 %v1240, 1.0
        %v1274 = vadd.f32 %v1242, 1.0
        %v1275 = vrcp.pop %v1243
        %v1276 = vmul.f32 %v1243, %v1275
        %v1277 = vsub.f32 1.0, %v1276
        %v1278 = vmul.f32 %v1275, %v1277
        %v1279 = vadd.f32 %v1275, %v1278
        %vm1280 = vweird.f32 %v1243
        %vm1281 = vweird.f32 %v1275
        %vm1282 = vmor %vm1280, %vm1281
        %v1283 = vsel %vm1282, %v1275, %v1279
        %v1284 = vand.u32 2147483647, %v1243
        %vm1285 = vcmp.eq.f32.partialorder %v1284, 8.507059e+37
        %v1286 = vand.u32 %v1243, 2147483648
        %v1287 = vor.u32 1.1754944e-38, %v1286
        %v1288 = vsel %vm1285, %v1287, %v1283
        %v1289 = vmul.f32 1.0, %v1288
        %v1290 = vrcp.pop %v1244
        %v1291 = vmul.f32 %v1244, %v1290
        %v1292 = vsub.f32 1.0, %v1291
        %v1293 = vmul.f32 %v1290, %v1292
        %v1294 = vadd.f32 %v1290, %v1293
        %vm1295 = vweird.f32 %v1244
        %vm1296 = vweird.f32 %v1290
        %vm1297 = vmor %vm1295, %vm1296
        %v1298 = vsel %vm1297, %v1290, %v1294
        %v1299 = vand.u32 2147483647, %v1244
        %vm1300 = vcmp.eq.f32.partialorder %v1299, 8.507059e+37
        %v1301 = vand.u32 %v1244, 2147483648
        %v1302 = vor.u32 1.1754944e-38, %v1301
        %v1303 = vsel %vm1300, %v1302, %v1298
        %v1304 = vmul.f32 1.0, %v1303
        %v1305 = vrcp.pop %v1245
        %v1306 = vmul.f32 %v1245, %v1305
        %v1307 = vsub.f32 1.0, %v1306
        %v1308 = vmul.f32 %v1305, %v1307
        %v1309 = vadd.f32 %v1305, %v1308
        %vm1310 = vweird.f32 %v1245
        %vm1311 = vweird.f32 %v1305
        %vm1312 = vmor %vm1310, %vm1311
        %v1313 = vsel %vm1312, %v1305, %v1309
        %v1314 = vand.u32 2147483647, %v1245
        %vm1315 = vcmp.eq.f32.partialorder %v1314, 8.507059e+37
        %v1316 = vand.u32 %v1245, 2147483648
        %v1317 = vor.u32 1.1754944e-38, %v1316
        %v1318 = vsel %vm1315, %v1317, %v1313
        %v1319 = vmul.f32 1.0, %v1318
        %v1320 = vrcp.pop %v1246
        %v1321 = vmul.f32 %v1246, %v1320
        %v1322 = vsub.f32 1.0, %v1321
        %v1323 = vmul.f32 %v1320, %v1322
        %v1324 = vadd.f32 %v1320, %v1323
        %vm1325 = vweird.f32 %v1246
        %vm1326 = vweird.f32 %v1320
        %vm1327 = vmor %vm1325, %vm1326
        %v1328 = vsel %vm1327, %v1320, %v1324
        %v1329 = vand.u32 2147483647, %v1246
        %vm1330 = vcmp.eq.f32.partialorder %v1329, 8.507059e+37
        %v1331 = vand.u32 %v1246, 2147483648
        %v1332 = vor.u32 1.1754944e-38, %v1331
        %v1333 = vsel %vm1330, %v1332, %v1328
        %v1334 = vmul.f32 1.0, %v1333
        %v1335 = vrcp.pop %v1247
        %v1336 = vmul.f32 %v1247, %v1335
        %v1337 = vsub.f32 1.0, %v1336
        %v1338 = vmul.f32 %v1335, %v1337
        %v1339 = vadd.f32 %v1335, %v1338
        %vm1340 = vweird.f32 %v1247
        %vm1341 = vweird.f32 %v1335
        %vm1342 = vmor %vm1340, %vm1341
        %v1343 = vsel %vm1342, %v1335, %v1339
        %v1344 = vand.u32 2147483647, %v1247
        %vm1345 = vcmp.eq.f32.partialorder %v1344, 8.507059e+37
        %v1346 = vand.u32 %v1247, 2147483648
        %v1347 = vor.u32 1.1754944e-38, %v1346
        %v1348 = vsel %vm1345, %v1347, %v1343
        %v1349 = vmul.f32 1.0, %v1348
        %v1350 = vrcp.pop %v1248
        %v1351 = vmul.f32 %v1248, %v1350
        %v1352 = vsub.f32 1.0, %v1351
        %v1353 = vmul.f32 %v1350, %v1352
        %v1354 = vadd.f32 %v1350, %v1353
        %vm1355 = vweird.f32 %v1248
        %vm1356 = vweird.f32 %v1350
        %vm1357 = vmor %vm1355, %vm1356
        %v1358 = vsel %vm1357, %v1350, %v1354
        %v1359 = vand.u32 2147483647, %v1248
        %vm1360 = vcmp.eq.f32.partialorder %v1359, 8.507059e+37
        %v1361 = vand.u32 %v1248, 2147483648
        %v1362 = vor.u32 1.1754944e-38, %v1361
        %v1363 = vsel %vm1360, %v1362, %v1358
        %v1364 = vmul.f32 1.0, %v1363
        %v1365 = vrcp.pop %v1249
        %v1366 = vmul.f32 %v1249, %v1365
        %v1367 = vsub.f32 1.0, %v1366
        %v1368 = vmul.f32 %v1365, %v1367
        %v1369 = vadd.f32 %v1365, %v1368
        %vm1370 = vweird.f32 %v1249
        %vm1371 = vweird.f32 %v1365
        %vm1372 = vmor %vm1370, %vm1371
        %v1373 = vsel %vm1372, %v1365, %v1369
        %v1374 = vand.u32 2147483647, %v1249
        %vm1375 = vcmp.eq.f32.partialorder %v1374, 8.507059e+37
        %v1376 = vand.u32 %v1249, 2147483648
        %v1377 = vor.u32 1.1754944e-38, %v1376
        %v1378 = vsel %vm1375, %v1377, %v1373
        %v1379 = vmul.f32 1.0, %v1378
        %v1380 = vrcp.pop %v1250
        %v1381 = vmul.f32 %v1250, %v1380
        %v1382 = vsub.f32 1.0, %v1381
        %v1383 = vmul.f32 %v1380, %v1382
        %v1384 = vadd.f32 %v1380, %v1383
        %vm1385 = vweird.f32 %v1250
        %vm1386 = vweird.f32 %v1380
        %vm1387 = vmor %vm1385, %vm1386
        %v1388 = vsel %vm1387, %v1380, %v1384
        %v1389 = vand.u32 2147483647, %v1250
        %vm1390 = vcmp.eq.f32.partialorder %v1389, 8.507059e+37
        %v1391 = vand.u32 %v1250, 2147483648
        %v1392 = vor.u32 1.1754944e-38, %v1391
        %v1393 = vsel %vm1390, %v1392, %v1388
        %v1394 = vmul.f32 1.0, %v1393
        %v1395 = vrcp.pop %v1251
        %v1396 = vmul.f32 %v1251, %v1395
        %v1397 = vsub.f32 1.0, %v1396
        %v1398 = vmul.f32 %v1395, %v1397
        %v1399 = vadd.f32 %v1395, %v1398
        %vm1400 = vweird.f32 %v1251
        %vm1401 = vweird.f32 %v1395
        %vm1402 = vmor %vm1400, %vm1401
        %v1403 = vsel %vm1402, %v1395, %v1399
        %v1404 = vand.u32 2147483647, %v1251
        %vm1405 = vcmp.eq.f32.partialorder %v1404, 8.507059e+37
        %v1406 = vand.u32 %v1251, 2147483648
        %v1407 = vor.u32 1.1754944e-38, %v1406
        %v1408 = vsel %vm1405, %v1407, %v1403
        %v1409 = vmul.f32 1.0, %v1408
        %v1410 = vrcp.pop %v1252
        %v1411 = vmul.f32 %v1252, %v1410
        %v1412 = vsub.f32 1.0, %v1411
        %v1413 = vmul.f32 %v1410, %v1412
        %v1414 = vadd.f32 %v1410, %v1413
        %vm1415 = vweird.f32 %v1252
        %vm1416 = vweird.f32 %v1410
        %vm1417 = vmor %vm1415, %vm1416
        %v1418 = vsel %vm1417, %v1410, %v1414
        %v1419 = vand.u32 2147483647, %v1252
        %vm1420 = vcmp.eq.f32.partialorder %v1419, 8.507059e+37
        %v1421 = vand.u32 %v1252, 2147483648
        %v1422 = vor.u32 1.1754944e-38, %v1421
        %v1423 = vsel %vm1420, %v1422, %v1418
        %v1424 = vmul.f32 1.0, %v1423
        %v1425 = vrcp.pop %v1253
        %v1426 = vmul.f32 %v1253, %v1425
        %v1427 = vsub.f32 1.0, %v1426
        %v1428 = vmul.f32 %v1425, %v1427
        %v1429 = vadd.f32 %v1425, %v1428
        %vm1430 = vweird.f32 %v1253
        %vm1431 = vweird.f32 %v1425
        %vm1432 = vmor %vm1430, %vm1431
        %v1433 = vsel %vm1432, %v1425, %v1429
        %v1434 = vand.u32 2147483647, %v1253
        %vm1435 = vcmp.eq.f32.partialorder %v1434, 8.507059e+37
        %v1436 = vand.u32 %v1253, 2147483648
        %v1437 = vor.u32 1.1754944e-38, %v1436
        %v1438 = vsel %vm1435, %v1437, %v1433
        %v1439 = vmul.f32 1.0, %v1438
        %v1440 = vrcp.pop %v1254
        %v1441 = vmul.f32 %v1254, %v1440
        %v1442 = vsub.f32 1.0, %v1441
        %v1443 = vmul.f32 %v1440, %v1442
        %v1444 = vadd.f32 %v1440, %v1443
        %vm1445 = vweird.f32 %v1254
        %vm1446 = vweird.f32 %v1440
        %vm1447 = vmor %vm1445, %vm1446
        %v1448 = vsel %vm1447, %v1440, %v1444
        %v1449 = vand.u32 2147483647, %v1254
        %vm1450 = vcmp.eq.f32.partialorder %v1449, 8.507059e+37
        %v1451 = vand.u32 %v1254, 2147483648
        %v1452 = vor.u32 1.1754944e-38, %v1451
        %v1453 = vsel %vm1450, %v1452, %v1448
        %v1454 = vmul.f32 1.0, %v1453
        %v1455 = vrcp.pop %v1255
        %v1456 = vmul.f32 %v1255, %v1455
        %v1457 = vsub.f32 1.0, %v1456
        %v1458 = vmul.f32 %v1455, %v1457
        %v1459 = vadd.f32 %v1455, %v1458
        %vm1460 = vweird.f32 %v1255
        %vm1461 = vweird.f32 %v1455
        %vm1462 = vmor %vm1460, %vm1461
        %v1463 = vsel %vm1462, %v1455, %v1459
        %v1464 = vand.u32 2147483647, %v1255
        %vm1465 = vcmp.eq.f32.partialorder %v1464, 8.507059e+37
        %v1466 = vand.u32 %v1255, 2147483648
        %v1467 = vor.u32 1.1754944e-38, %v1466
        %v1468 = vsel %vm1465, %v1467, %v1463
        %v1469 = vmul.f32 1.0, %v1468
        %v1470 = vrcp.pop %v1256
        %v1471 = vmul.f32 %v1256, %v1470
        %v1472 = vsub.f32 1.0, %v1471
        %v1473 = vmul.f32 %v1470, %v1472
        %v1474 = vadd.f32 %v1470, %v1473
        %vm1475 = vweird.f32 %v1256
        %vm1476 = vweird.f32 %v1470
        %vm1477 = vmor %vm1475, %vm1476
        %v1478 = vsel %vm1477, %v1470, %v1474
        %v1479 = vand.u32 2147483647, %v1256
        %vm1480 = vcmp.eq.f32.partialorder %v1479, 8.507059e+37
        %v1481 = vand.u32 %v1256, 2147483648
        %v1482 = vor.u32 1.1754944e-38, %v1481
        %v1483 = vsel %vm1480, %v1482, %v1478
        %v1484 = vmul.f32 1.0, %v1483
        %v1485 = vrcp.pop %v1257
        %v1486 = vmul.f32 %v1257, %v1485
        %v1487 = vsub.f32 1.0, %v1486
        %v1488 = vmul.f32 %v1485, %v1487
        %v1489 = vadd.f32 %v1485, %v1488
        %vm1490 = vweird.f32 %v1257
        %vm1491 = vweird.f32 %v1485
        %vm1492 = vmor %vm1490, %vm1491
        %v1493 = vsel %vm1492, %v1485, %v1489
        %v1494 = vand.u32 2147483647, %v1257
        %vm1495 = vcmp.eq.f32.partialorder %v1494, 8.507059e+37
        %v1496 = vand.u32 %v1257, 2147483648
        %v1497 = vor.u32 1.1754944e-38, %v1496
        %v1498 = vsel %vm1495, %v1497, %v1493
        %v1499 = vmul.f32 1.0, %v1498
        %v1500 = vrcp.pop %v1258
        %v1501 = vmul.f32 %v1258, %v1500
        %v1502 = vsub.f32 1.0, %v1501
        %v1503 = vmul.f32 %v1500, %v1502
        %v1504 = vadd.f32 %v1500, %v1503
        %vm1505 = vweird.f32 %v1258
        %vm1506 = vweird.f32 %v1500
        %vm1507 = vmor %vm1505, %vm1506
        %v1508 = vsel %vm1507, %v1500, %v1504
        %v1509 = vand.u32 2147483647, %v1258
        %vm1510 = vcmp.eq.f32.partialorder %v1509, 8.507059e+37
        %v1511 = vand.u32 %v1258, 2147483648
        %v1512 = vor.u32 1.1754944e-38, %v1511
        %v1513 = vsel %vm1510, %v1512, %v1508
        %v1514 = vmul.f32 1.0, %v1513
        %v1515 = vrcp.pop %v1259
        %v1516 = vmul.f32 %v1259, %v1515
        %v1517 = vsub.f32 1.0, %v1516
        %v1518 = vmul.f32 %v1515, %v1517
        %v1519 = vadd.f32 %v1515, %v1518
        %vm1520 = vweird.f32 %v1259
        %vm1521 = vweird.f32 %v1515
        %vm1522 = vmor %vm1520, %vm1521
        %v1523 = vsel %vm1522, %v1515, %v1519
        %v1524 = vand.u32 2147483647, %v1259
        %vm1525 = vcmp.eq.f32.partialorder %v1524, 8.507059e+37
        %v1526 = vand.u32 %v1259, 2147483648
        %v1527 = vor.u32 1.1754944e-38, %v1526
        %v1528 = vsel %vm1525, %v1527, %v1523
        %v1529 = vmul.f32 1.0, %v1528
        %v1530 = vrcp.pop %v1260
        %v1531 = vmul.f32 %v1260, %v1530
        %v1532 = vsub.f32 1.0, %v1531
        %v1533 = vmul.f32 %v1530, %v1532
        %v1534 = vadd.f32 %v1530, %v1533
        %vm1535 = vweird.f32 %v1260
        %vm1536 = vweird.f32 %v1530
        %vm1537 = vmor %vm1535, %vm1536
        %v1538 = vsel %vm1537, %v1530, %v1534
        %v1539 = vand.u32 2147483647, %v1260
        %vm1540 = vcmp.eq.f32.partialorder %v1539, 8.507059e+37
        %v1541 = vand.u32 %v1260, 2147483648
        %v1542 = vor.u32 1.1754944e-38, %v1541
        %v1543 = vsel %vm1540, %v1542, %v1538
        %v1544 = vmul.f32 1.0, %v1543
        %v1545 = vrcp.pop %v1261
        %v1546 = vmul.f32 %v1261, %v1545
        %v1547 = vsub.f32 1.0, %v1546
        %v1548 = vmul.f32 %v1545, %v1547
        %v1549 = vadd.f32 %v1545, %v1548
        %vm1550 = vweird.f32 %v1261
        %vm1551 = vweird.f32 %v1545
        %vm1552 = vmor %vm1550, %vm1551
        %v1553 = vsel %vm1552, %v1545, %v1549
        %v1554 = vand.u32 2147483647, %v1261
        %vm1555 = vcmp.eq.f32.partialorder %v1554, 8.507059e+37
        %v1556 = vand.u32 %v1261, 2147483648
        %v1557 = vor.u32 1.1754944e-38, %v1556
        %v1558 = vsel %vm1555, %v1557, %v1553
        %v1559 = vmul.f32 1.0, %v1558
        %v1560 = vrcp.pop %v1262
        %v1561 = vmul.f32 %v1262, %v1560
        %v1562 = vsub.f32 1.0, %v1561
        %v1563 = vmul.f32 %v1560, %v1562
        %v1564 = vadd.f32 %v1560, %v1563
        %vm1565 = vweird.f32 %v1262
        %vm1566 = vweird.f32 %v1560
        %vm1567 = vmor %vm1565, %vm1566
        %v1568 = vsel %vm1567, %v1560, %v1564
        %v1569 = vand.u32 2147483647, %v1262
        %vm1570 = vcmp.eq.f32.partialorder %v1569, 8.507059e+37
        %v1571 = vand.u32 %v1262, 2147483648
        %v1572 = vor.u32 1.1754944e-38, %v1571
        %v1573 = vsel %vm1570, %v1572, %v1568
        %v1574 = vmul.f32 1.0, %v1573
        %v1575 = vrcp.pop %v1263
        %v1576 = vmul.f32 %v1263, %v1575
        %v1577 = vsub.f32 1.0, %v1576
        %v1578 = vmul.f32 %v1575, %v1577
        %v1579 = vadd.f32 %v1575, %v1578
        %vm1580 = vweird.f32 %v1263
        %vm1581 = vweird.f32 %v1575
        %vm1582 = vmor %vm1580, %vm1581
        %v1583 = vsel %vm1582, %v1575, %v1579
        %v1584 = vand.u32 2147483647, %v1263
        %vm1585 = vcmp.eq.f32.partialorder %v1584, 8.507059e+37
        %v1586 = vand.u32 %v1263, 2147483648
        %v1587 = vor.u32 1.1754944e-38, %v1586
        %v1588 = vsel %vm1585, %v1587, %v1583
        %v1589 = vmul.f32 1.0, %v1588
        %v1590 = vrcp.pop %v1264
        %v1591 = vmul.f32 %v1264, %v1590
        %v1592 = vsub.f32 1.0, %v1591
        %v1593 = vmul.f32 %v1590, %v1592
        %v1594 = vadd.f32 %v1590, %v1593
        %vm1595 = vweird.f32 %v1264
        %vm1596 = vweird.f32 %v1590
        %vm1597 = vmor %vm1595, %vm1596
        %v1598 = vsel %vm1597, %v1590, %v1594
        %v1599 = vand.u32 2147483647, %v1264
        %vm1600 = vcmp.eq.f32.partialorder %v1599, 8.507059e+37
        %v1601 = vand.u32 %v1264, 2147483648
        %v1602 = vor.u32 1.1754944e-38, %v1601
        %v1603 = vsel %vm1600, %v1602, %v1598
        %v1604 = vmul.f32 1.0, %v1603
        %v1605 = vrcp.pop %v1265
        %v1606 = vmul.f32 %v1265, %v1605
        %v1607 = vsub.f32 1.0, %v1606
        %v1608 = vmul.f32 %v1605, %v1607
        %v1609 = vadd.f32 %v1605, %v1608
        %vm1610 = vweird.f32 %v1265
        %vm1611 = vweird.f32 %v1605
        %vm1612 = vmor %vm1610, %vm1611
        %v1613 = vsel %vm1612, %v1605, %v1609
        %v1614 = vand.u32 2147483647, %v1265
        %vm1615 = vcmp.eq.f32.partialorder %v1614, 8.507059e+37
        %v1616 = vand.u32 %v1265, 2147483648
        %v1617 = vor.u32 1.1754944e-38, %v1616
        %v1618 = vsel %vm1615, %v1617, %v1613
        %v1619 = vmul.f32 1.0, %v1618
        %v1620 = vrcp.pop %v1266
        %v1621 = vmul.f32 %v1266, %v1620
        %v1622 = vsub.f32 1.0, %v1621
        %v1623 = vmul.f32 %v1620, %v1622
        %v1624 = vadd.f32 %v1620, %v1623
        %vm1625 = vweird.f32 %v1266
        %vm1626 = vweird.f32 %v1620
        %vm1627 = vmor %vm1625, %vm1626
        %v1628 = vsel %vm1627, %v1620, %v1624
        %v1629 = vand.u32 2147483647, %v1266
        %vm1630 = vcmp.eq.f32.partialorder %v1629, 8.507059e+37
        %v1631 = vand.u32 %v1266, 2147483648
        %v1632 = vor.u32 1.1754944e-38, %v1631
        %v1633 = vsel %vm1630, %v1632, %v1628
        %v1634 = vmul.f32 1.0, %v1633
        %v1635 = vrcp.pop %v1267
        %v1636 = vmul.f32 %v1267, %v1635
        %v1637 = vsub.f32 1.0, %v1636
        %v1638 = vmul.f32 %v1635, %v1637
        %v1639 = vadd.f32 %v1635, %v1638
        %vm1640 = vweird.f32 %v1267
        %vm1641 = vweird.f32 %v1635
        %vm1642 = vmor %vm1640, %vm1641
        %v1643 = vsel %vm1642, %v1635, %v1639
        %v1644 = vand.u32 2147483647, %v1267
        %vm1645 = vcmp.eq.f32.partialorder %v1644, 8.507059e+37
        %v1646 = vand.u32 %v1267, 2147483648
        %v1647 = vor.u32 1.1754944e-38, %v1646
        %v1648 = vsel %vm1645, %v1647, %v1643
        %v1649 = vmul.f32 1.0, %v1648
        %v1650 = vrcp.pop %v1268
        %v1651 = vmul.f32 %v1268, %v1650
        %v1652 = vsub.f32 1.0, %v1651
        %v1653 = vmul.f32 %v1650, %v1652
        %v1654 = vadd.f32 %v1650, %v1653
        %vm1655 = vweird.f32 %v1268
        %vm1656 = vweird.f32 %v1650
        %vm1657 = vmor %vm1655, %vm1656
        %v1658 = vsel %vm1657, %v1650, %v1654
        %v1659 = vand.u32 2147483647, %v1268
        %vm1660 = vcmp.eq.f32.partialorder %v1659, 8.507059e+37
        %v1661 = vand.u32 %v1268, 2147483648
        %v1662 = vor.u32 1.1754944e-38, %v1661
        %v1663 = vsel %vm1660, %v1662, %v1658
        %v1664 = vmul.f32 1.0, %v1663
        %v1665 = vrcp.pop %v1269
        %v1666 = vmul.f32 %v1269, %v1665
        %v1667 = vsub.f32 1.0, %v1666
        %v1668 = vmul.f32 %v1665, %v1667
        %v1669 = vadd.f32 %v1665, %v1668
        %vm1670 = vweird.f32 %v1269
        %vm1671 = vweird.f32 %v1665
        %vm1672 = vmor %vm1670, %vm1671
        %v1673 = vsel %vm1672, %v1665, %v1669
        %v1674 = vand.u32 2147483647, %v1269
        %vm1675 = vcmp.eq.f32.partialorder %v1674, 8.507059e+37
        %v1676 = vand.u32 %v1269, 2147483648
        %v1677 = vor.u32 1.1754944e-38, %v1676
        %v1678 = vsel %vm1675, %v1677, %v1673
        %v1679 = vmul.f32 1.0, %v1678
        %v1680 = vrcp.pop %v1270
        %v1681 = vmul.f32 %v1270, %v1680
        %v1682 = vsub.f32 1.0, %v1681
        %v1683 = vmul.f32 %v1680, %v1682
        %v1684 = vadd.f32 %v1680, %v1683
        %vm1685 = vweird.f32 %v1270
        %vm1686 = vweird.f32 %v1680
        %vm1687 = vmor %vm1685, %vm1686
        %v1688 = vsel %vm1687, %v1680, %v1684
        %v1689 = vand.u32 2147483647, %v1270
        %vm1690 = vcmp.eq.f32.partialorder %v1689, 8.507059e+37
        %v1691 = vand.u32 %v1270, 2147483648
        %v1692 = vor.u32 1.1754944e-38, %v1691
        %v1693 = vsel %vm1690, %v1692, %v1688
        %v1694 = vmul.f32 1.0, %v1693
        %v1695 = vrcp.pop %v1271
        %v1696 = vmul.f32 %v1271, %v1695
        %v1697 = vsub.f32 1.0, %v1696
        %v1698 = vmul.f32 %v1695, %v1697
        %v1699 = vadd.f32 %v1695, %v1698
        %vm1700 = vweird.f32 %v1271
        %vm1701 = vweird.f32 %v1695
        %vm1702 = vmor %vm1700, %vm1701
        %v1703 = vsel %vm1702, %v1695, %v1699
        %v1704 = vand.u32 2147483647, %v1271
        %vm1705 = vcmp.eq.f32.partialorder %v1704, 8.507059e+37
        %v1706 = vand.u32 %v1271, 2147483648
        %v1707 = vor.u32 1.1754944e-38, %v1706
        %v1708 = vsel %vm1705, %v1707, %v1703
        %v1709 = vmul.f32 1.0, %v1708
        %v1710 = vrcp.pop %v1272
        %v1711 = vmul.f32 %v1272, %v1710
        %v1712 = vsub.f32 1.0, %v1711
        %v1713 = vmul.f32 %v1710, %v1712
        %v1714 = vadd.f32 %v1710, %v1713
        %vm1715 = vweird.f32 %v1272
        %vm1716 = vweird.f32 %v1710
        %vm1717 = vmor %vm1715, %vm1716
        %v1718 = vsel %vm1717, %v1710, %v1714
        %v1719 = vand.u32 2147483647, %v1272
        %vm1720 = vcmp.eq.f32.partialorder %v1719, 8.507059e+37
        %v1721 = vand.u32 %v1272, 2147483648
        %v1722 = vor.u32 1.1754944e-38, %v1721
        %v1723 = vsel %vm1720, %v1722, %v1718
        %v1724 = vmul.f32 1.0, %v1723
        %v1725 = vrcp.pop %v1273
        %v1726 = vmul.f32 %v1273, %v1725
        %v1727 = vsub.f32 1.0, %v1726
        %v1728 = vmul.f32 %v1725, %v1727
        %v1729 = vadd.f32 %v1725, %v1728
        %vm1730 = vweird.f32 %v1273
        %vm1731 = vweird.f32 %v1725
        %vm1732 = vmor %vm1730, %vm1731
        %v1733 = vsel %vm1732, %v1725, %v1729
        %v1734 = vand.u32 2147483647, %v1273
        %vm1735 = vcmp.eq.f32.partialorder %v1734, 8.507059e+37
        %v1736 = vand.u32 %v1273, 2147483648
        %v1737 = vor.u32 1.1754944e-38, %v1736
        %v1738 = vsel %vm1735, %v1737, %v1733
        %v1739 = vmul.f32 1.0, %v1738
        %v1740 = vrcp.pop %v1274
        %v1741 = vmul.f32 %v1274, %v1740
        %v1742 = vsub.f32 1.0, %v1741
        %v1743 = vmul.f32 %v1740, %v1742
        %v1744 = vadd.f32 %v1740, %v1743
        %vm1745 = vweird.f32 %v1274
        %vm1746 = vweird.f32 %v1740
        %vm1747 = vmor %vm1745, %vm1746
        %v1748 = vsel %vm1747, %v1740, %v1744
        %v1749 = vand.u32 2147483647, %v1274
        %vm1750 = vcmp.eq.f32.partialorder %v1749, 8.507059e+37
        %v1751 = vand.u32 %v1274, 2147483648
        %v1752 = vor.u32 1.1754944e-38, %v1751
        %v1753 = vsel %vm1750, %v1752, %v1748
        %v1754 = vmul.f32 1.0, %v1753
        %v1755 = vmul.f32 %v814, %v1289
        %v1756 = vmul.f32 %v912, %v1304
        %v1757 = vmul.f32 %v816, %v1319
        %v1758 = vmul.f32 %v914, %v1334
        %v1759 = vmul.f32 %v819, %v1349
        %v1760 = vmul.f32 %v917, %v1364
        %v1761 = vmul.f32 %v821, %v1379
        %v1762 = vmul.f32 %v919, %v1394
        %v1763 = vmul.f32 %v824, %v1409
        %v1764 = vmul.f32 %v922, %v1424
        %v1765 = vmul.f32 %v826, %v1439
        %v1766 = vmul.f32 %v924, %v1454
        %v1767 = vmul.f32 %v829, %v1469
        %v1768 = vmul.f32 %v927, %v1484
        %v1769 = vmul.f32 %v831, %v1499
        %v1770 = vmul.f32 %v929, %v1514
        %v1771 = vmul.f32 %v834, %v1529
        %v1772 = vmul.f32 %v932, %v1544
        %v1773 = vmul.f32 %v836, %v1559
        %v1774 = vmul.f32 %v934, %v1574
        %v1775 = vmul.f32 %v839, %v1589
        %v1776 = vmul.f32 %v937, %v1604
        %v1777 = vmul.f32 %v841, %v1619
        %v1778 = vmul.f32 %v939, %v1634
        %v1779 = vmul.f32 %v844, %v1649
        %v1780 = vmul.f32 %v942, %v1664
        %v1781 = vmul.f32 %v846, %v1679
        %v1782 = vmul.f32 %v944, %v1694
        %v1783 = vmul.f32 %v849, %v1709
        %v1784 = vmul.f32 %v947, %v1724
        %v1785 = vmul.f32 %v851, %v1739
        %v1786 = vmul.f32 %v949, %v1754
        %v1787 = vmul.f32 %v1755, %v1010
        %v1788 = vmul.f32 %v1756, %v1108
        %v1789 = vmul.f32 %v1757, %v1012
        %v1790 = vmul.f32 %v1758, %v1110
        %v1791 = vmul.f32 %v1759, %v1015
        %v1792 = vmul.f32 %v1760, %v1113
        %v1793 = vmul.f32 %v1761, %v1017
        %v1794 = vmul.f32 %v1762, %v1115
        %v1795 = vmul.f32 %v1763, %v1020
        %v1796 = vmul.f32 %v1764, %v1118
        %v1797 = vmul.f32 %v1765, %v1022
        %v1798 = vmul.f32 %v1766, %v1120
        %v1799 = vmul.f32 %v1767, %v1025
        %v1800 = vmul.f32 %v1768, %v1123
        %v1801 = vmul.f32 %v1769, %v1027
        %v1802 = vmul.f32 %v1770, %v1125
        %v1803 = vmul.f32 %v1771, %v1030
        %v1804 = vmul.f32 %v1772, %v1128
        %v1805 = vmul.f32 %v1773, %v1032
        %v1806 = vmul.f32 %v1774, %v1130
        %v1807 = vmul.f32 %v1775, %v1035
        %v1808 = vmul.f32 %v1776, %v1133
        %v1809 = vmul.f32 %v1777, %v1037
        %v1810 = vmul.f32 %v1778, %v1135
        %v1811 = vmul.f32 %v1779, %v1040
        %v1812 = vmul.f32 %v1780, %v1138
        %v1813 = vmul.f32 %v1781, %v1042
        %v1814 = vmul.f32 %v1782, %v1140
        %v1815 = vmul.f32 %v1783, %v1045
        %v1816 = vmul.f32 %v1784, %v1143
        %v1817 = vmul.f32 %v1785, %v1047
        %v1818 = vmul.f32 %v1786, %v1145
        %v1819 = vld [vmem:[#allocation2] sm:$0xff]
        %v1820 = vld [vmem:[#allocation2 + $0x8] sm:$0xff]
        %v1821 = vld [vmem:[#allocation2 + $0x10] sm:$0xff]
        %v1822 = vld [vmem:[#allocation2 + $0x18] sm:$0xff]
        %v1823 = vld [vmem:[#allocation2 + $0x20] sm:$0xff]
        %v1824 = vld [vmem:[#allocation2 + $0x28] sm:$0xff]
        %v1825 = vld [vmem:[#allocation2 + $0x30] sm:$0xff]
        %v1826 = vld [vmem:[#allocation2 + $0x38] sm:$0xff]
        %v1827 = vld [vmem:[#allocation2 + $0x40] sm:$0xff]
        %v1828 = vld [vmem:[#allocation2 + $0x48] sm:$0xff]
        %v1829 = vld [vmem:[#allocation2 + $0x50] sm:$0xff]
        %v1830 = vld [vmem:[#allocation2 + $0x58] sm:$0xff]
        %v1831 = vld [vmem:[#allocation2 + $0x60] sm:$0xff]
        %v1832 = vld [vmem:[#allocation2 + $0x68] sm:$0xff]
        %v1833 = vld [vmem:[#allocation2 + $0x70] sm:$0xff]
        %v1834 = vld [vmem:[#allocation2 + $0x78] sm:$0xff]
        %v1835 = vld [vmem:[#allocation2 + $0x80] sm:$0xff]
        %v1836 = vld [vmem:[#allocation2 + $0x88] sm:$0xff]
        %v1837 = vld [vmem:[#allocation2 + $0x90] sm:$0xff]
        %v1838 = vld [vmem:[#allocation2 + $0x98] sm:$0xff]
        %v1839 = vld [vmem:[#allocation2 + $0xa0] sm:$0xff]
        %v1840 = vld [vmem:[#allocation2 + $0xa8] sm:$0xff]
        %v1841 = vld [vmem:[#allocation2 + $0xb0] sm:$0xff]
        %v1842 = vld [vmem:[#allocation2 + $0xb8] sm:$0xff]
        %v1843 = vld [vmem:[#allocation2 + $0xc0] sm:$0xff]
        %v1844 = vld [vmem:[#allocation2 + $0xc8] sm:$0xff]
        %v1845 = vld [vmem:[#allocation2 + $0xd0] sm:$0xff]
        %v1846 = vld [vmem:[#allocation2 + $0xd8] sm:$0xff]
        %v1847 = vld [vmem:[#allocation2 + $0xe0] sm:$0xff]
        %v1848 = vld [vmem:[#allocation2 + $0xe8] sm:$0xff]
        %v1849 = vld [vmem:[#allocation2 + $0xf0] sm:$0xff]
        %v1850 = vld [vmem:[#allocation2 + $0xf8] sm:$0xff]
        %v1851 = vpack.c.bf16 %v1789, %v1787
        %v1852 = vpack.c.bf16 %v1790, %v1788
        %v1853 = vpack.c.bf16 %v1793, %v1791
        %v1854 = vpack.c.bf16 %v1794, %v1792
        %v1855 = vpack.c.bf16 %v1797, %v1795
        %v1856 = vpack.c.bf16 %v1798, %v1796
        %v1857 = vpack.c.bf16 %v1801, %v1799
        %v1858 = vpack.c.bf16 %v1802, %v1800
        %v1859 = vpack.c.bf16 %v1805, %v1803
        %v1860 = vpack.c.bf16 %v1806, %v1804
        %v1861 = vpack.c.bf16 %v1809, %v1807
        %v1862 = vpack.c.bf16 %v1810, %v1808
        %v1863 = vpack.c.bf16 %v1813, %v1811
        %v1864 = vpack.c.bf16 %v1814, %v1812
        %v1865 = vpack.c.bf16 %v1817, %v1815
        %v1866 = vpack.c.bf16 %v1818, %v1816
        %v1867 = vld [vmem:[%s251] sm:$0xff]
        %v1868 = vld [vmem:[%s251 + $0x8] sm:$0xff]
        %v1869 = vld [vmem:[%s251 + $0x10] sm:$0xff]
        %v1870 = vld [vmem:[%s251 + $0x18] sm:$0xff]
        %v1871 = vld [vmem:[%s251 + $0x20] sm:$0xff]
        %v1872 = vld [vmem:[%s251 + $0x28] sm:$0xff]
        %v1873 = vld [vmem:[%s251 + $0x30] sm:$0xff]
        %v1874 = vld [vmem:[%s251 + $0x38] sm:$0xff]
        %v1875 = vld [vmem:[%s251 + $0x40] sm:$0xff]
        %v1876 = vld [vmem:[%s251 + $0x48] sm:$0xff]
        %v1877 = vld [vmem:[%s251 + $0x50] sm:$0xff]
        %v1878 = vld [vmem:[%s251 + $0x58] sm:$0xff]
        %v1879 = vld [vmem:[%s251 + $0x60] sm:$0xff]
        %v1880 = vld [vmem:[%s251 + $0x68] sm:$0xff]
        %v1881 = vld [vmem:[%s251 + $0x70] sm:$0xff]
        %v1882 = vld [vmem:[%s251 + $0x78] sm:$0xff]
        %v1883 = vld [vmem:[%s251 + $0x80] sm:$0xff]
        %v1884 = vld [vmem:[%s251 + $0x88] sm:$0xff]
        %v1885 = vld [vmem:[%s251 + $0x90] sm:$0xff]
        %v1886 = vld [vmem:[%s251 + $0x98] sm:$0xff]
        %v1887 = vld [vmem:[%s251 + $0xa0] sm:$0xff]
        %v1888 = vld [vmem:[%s251 + $0xa8] sm:$0xff]
        %v1889 = vld [vmem:[%s251 + $0xb0] sm:$0xff]
        %v1890 = vld [vmem:[%s251 + $0xb8] sm:$0xff]
        %v1891 = vld [vmem:[%s251 + $0xc0] sm:$0xff]
        %v1892 = vld [vmem:[%s251 + $0xc8] sm:$0xff]
        %v1893 = vld [vmem:[%s251 + $0xd0] sm:$0xff]
        %v1894 = vld [vmem:[%s251 + $0xd8] sm:$0xff]
        %v1895 = vld [vmem:[%s251 + $0xe0] sm:$0xff]
        %v1896 = vld [vmem:[%s251 + $0xe8] sm:$0xff]
        %v1897 = vld [vmem:[%s251 + $0xf0] sm:$0xff]
        %v1898 = vld [vmem:[%s251 + $0xf8] sm:$0xff]
        %v1931 = vunpack.c.l.b16 %v1867
        %v1932 = vunpack.c.h.b16 %v1867
        %v1933 = vunpack.c.l.b16 %v1868
        %v1934 = vunpack.c.h.b16 %v1868
        %v1935 = vunpack.c.l.b16 %v1869
        %v1936 = vunpack.c.h.b16 %v1869
        %v1937 = vunpack.c.l.b16 %v1870
        %v1938 = vunpack.c.h.b16 %v1870
        %v1939 = vunpack.c.l.b16 %v1871
        %v1940 = vunpack.c.h.b16 %v1871
        %v1941 = vunpack.c.l.b16 %v1872
        %v1942 = vunpack.c.h.b16 %v1872
        %v1943 = vunpack.c.l.b16 %v1873
        %v1944 = vunpack.c.h.b16 %v1873
        %v1945 = vunpack.c.l.b16 %v1874
        %v1946 = vunpack.c.h.b16 %v1874
        %v1947 = vunpack.c.l.b16 %v1875
        %v1948 = vunpack.c.h.b16 %v1875
        %v1949 = vunpack.c.l.b16 %v1876
        %v1950 = vunpack.c.h.b16 %v1876
        %v1951 = vunpack.c.l.b16 %v1877
        %v1952 = vunpack.c.h.b16 %v1877
        %v1953 = vunpack.c.l.b16 %v1878
        %v1954 = vunpack.c.h.b16 %v1878
        %v1955 = vunpack.c.l.b16 %v1879
        %v1956 = vunpack.c.h.b16 %v1879
        %v1957 = vunpack.c.l.b16 %v1880
        %v1958 = vunpack.c.h.b16 %v1880
        %v1959 = vunpack.c.l.b16 %v1881
        %v1960 = vunpack.c.h.b16 %v1881
        %v1961 = vunpack.c.l.b16 %v1882
        %v1962 = vunpack.c.h.b16 %v1882
        %v1963 = vunpack.c.l.b16 %v1883
        %v1964 = vunpack.c.h.b16 %v1883
        %v1965 = vunpack.c.l.b16 %v1884
        %v1966 = vunpack.c.h.b16 %v1884
        %v1967 = vunpack.c.l.b16 %v1885
        %v1968 = vunpack.c.h.b16 %v1885
        %v1969 = vunpack.c.l.b16 %v1886
        %v1970 = vunpack.c.h.b16 %v1886
        %v1971 = vunpack.c.l.b16 %v1887
        %v1972 = vunpack.c.h.b16 %v1887
        %v1973 = vunpack.c.l.b16 %v1888
        %v1974 = vunpack.c.h.b16 %v1888
        %v1975 = vunpack.c.l.b16 %v1889
        %v1976 = vunpack.c.h.b16 %v1889
        %v1977 = vunpack.c.l.b16 %v1890
        %v1978 = vunpack.c.h.b16 %v1890
        %v1979 = vunpack.c.l.b16 %v1891
        %v1980 = vunpack.c.h.b16 %v1891
        %v1981 = vunpack.c.l.b16 %v1892
        %v1982 = vunpack.c.h.b16 %v1892
        %v1983 = vunpack.c.l.b16 %v1893
        %v1984 = vunpack.c.h.b16 %v1893
        %v1985 = vunpack.c.l.b16 %v1894
        %v1986 = vunpack.c.h.b16 %v1894
        %v1987 = vunpack.c.l.b16 %v1895
        %v1988 = vunpack.c.h.b16 %v1895
        %v1989 = vunpack.c.l.b16 %v1896
        %v1990 = vunpack.c.h.b16 %v1896
        %v1991 = vunpack.c.l.b16 %v1897
        %v1992 = vunpack.c.h.b16 %v1897
        %v1993 = vunpack.c.l.b16 %v1898
        %v1994 = vunpack.c.h.b16 %v1898
        %v1995 = vpack.c.b16 %v1933, %v1931
        %v1996 = vpack.c.b16 %v1934, %v1932
        %v1997 = vpack.c.b16 %v1937, %v1935
        %v1998 = vpack.c.b16 %v1938, %v1936
        %v1999 = vpack.c.b16 %v1941, %v1939
        %v2000 = vpack.c.b16 %v1942, %v1940
        %v2001 = vpack.c.b16 %v1945, %v1943
        %v2002 = vpack.c.b16 %v1946, %v1944
        %v2003 = vpack.c.b16 %v1949, %v1947
        %v2004 = vpack.c.b16 %v1950, %v1948
        %v2005 = vpack.c.b16 %v1953, %v1951
        %v2006 = vpack.c.b16 %v1954, %v1952
        %v2007 = vpack.c.b16 %v1957, %v1955
        %v2008 = vpack.c.b16 %v1958, %v1956
        %v2009 = vpack.c.b16 %v1961, %v1959
        %v2010 = vpack.c.b16 %v1962, %v1960
        %v2011 = vpack.c.b16 %v1965, %v1963
        %v2012 = vpack.c.b16 %v1966, %v1964
        %v2013 = vpack.c.b16 %v1969, %v1967
        %v2014 = vpack.c.b16 %v1970, %v1968
        %v2015 = vpack.c.b16 %v1973, %v1971
        %v2016 = vpack.c.b16 %v1974, %v1972
        %v2017 = vpack.c.b16 %v1977, %v1975
        %v2018 = vpack.c.b16 %v1978, %v1976
        %v2019 = vpack.c.b16 %v1981, %v1979
        %v2020 = vpack.c.b16 %v1982, %v1980
        %v2021 = vpack.c.b16 %v1985, %v1983
        %v2022 = vpack.c.b16 %v1986, %v1984
        %v2023 = vpack.c.b16 %v1989, %v1987
        %v2024 = vpack.c.b16 %v1990, %v1988
        %v2025 = vpack.c.b16 %v1993, %v1991
        %v2026 = vpack.c.b16 %v1994, %v1992
        %2059 = vmatpush.bf16.msra.mxu0 %v2009
        %2060 = vmatpush.bf16.msra.mxu0 %v2007
        %2061 = vmatpush.bf16.msra.mxu0 %v2005
        %2062 = vmatpush.bf16.msra.mxu0 %v2003
        %2063 = vmatpush.bf16.msra.mxu0 %v2001
        %2064 = vmatpush.bf16.msra.mxu0 %v1999
        %2065 = vmatpush.bf16.msra.mxu0 %v1997
        %2066 = vmatpush.bf16.msra.mxu0 %v1995
        %2067 = vmatmul.bf16.gmra.mxu0 %v1851
        %v2068 = vpop.f32.mrf.mxu0
        %v2069 = vadd.f32 0.0, %v2068
        %v2070 = vpop.f32.mrf.mxu0
        %v2071 = vadd.f32 0.0, %v2070
        %2072 = vmatmul.bf16.gmra.mxu0 %v1853
        %v2073 = vpop.f32.mrf.mxu0
        %v2074 = vadd.f32 0.0, %v2073
        %v2075 = vpop.f32.mrf.mxu0
        %v2076 = vadd.f32 0.0, %v2075
        %2077 = vmatmul.bf16.gmra.mxu0 %v1855
        %v2078 = vpop.f32.mrf.mxu0
        %v2079 = vadd.f32 0.0, %v2078
        %v2080 = vpop.f32.mrf.mxu0
        %v2081 = vadd.f32 0.0, %v2080
        %2082 = vmatmul.bf16.gmra.mxu0 %v1857
        %v2083 = vpop.f32.mrf.mxu0
        %v2084 = vadd.f32 0.0, %v2083
        %v2085 = vpop.f32.mrf.mxu0
        %v2086 = vadd.f32 0.0, %v2085
        %2087 = vmatmul.bf16.gmra.mxu0 %v1859
        %v2088 = vpop.f32.mrf.mxu0
        %v2089 = vadd.f32 0.0, %v2088
        %v2090 = vpop.f32.mrf.mxu0
        %v2091 = vadd.f32 0.0, %v2090
        %2092 = vmatmul.bf16.gmra.mxu0 %v1861
        %v2093 = vpop.f32.mrf.mxu0
        %v2094 = vadd.f32 0.0, %v2093
        %v2095 = vpop.f32.mrf.mxu0
        %v2096 = vadd.f32 0.0, %v2095
        %2097 = vmatmul.bf16.gmra.mxu0 %v1863
        %v2098 = vpop.f32.mrf.mxu0
        %v2099 = vadd.f32 0.0, %v2098
        %v2100 = vpop.f32.mrf.mxu0
        %v2101 = vadd.f32 0.0, %v2100
        %2102 = vmatmul.bf16.gmra.mxu0 %v1865
        %v2103 = vpop.f32.mrf.mxu0
        %v2104 = vadd.f32 0.0, %v2103
        %v2105 = vpop.f32.mrf.mxu0
        %v2106 = vadd.f32 0.0, %v2105
        %2107 = vdwg.mxu0
        %2108 = vmatpush.bf16.msra.mxu0 %v2025
        %2109 = vmatpush.bf16.msra.mxu0 %v2023
        %2110 = vmatpush.bf16.msra.mxu0 %v2021
        %2111 = vmatpush.bf16.msra.mxu0 %v2019
        %2112 = vmatpush.bf16.msra.mxu0 %v2017
        %2113 = vmatpush.bf16.msra.mxu0 %v2015
        %2114 = vmatpush.bf16.msra.mxu0 %v2013
        %2115 = vmatpush.bf16.msra.mxu0 %v2011
        %2116 = vmatmul.bf16.gmra.mxu0 %v1852
        %v2117 = vpop.f32.mrf.mxu0
        %v2118 = vadd.f32 %v2069, %v2117
        %v2119 = vpop.f32.mrf.mxu0
        %v2120 = vadd.f32 %v2071, %v2119
        %2121 = vmatmul.bf16.gmra.mxu0 %v1854
        %v2122 = vpop.f32.mrf.mxu0
        %v2123 = vadd.f32 %v2074, %v2122
        %v2124 = vpop.f32.mrf.mxu0
        %v2125 = vadd.f32 %v2076, %v2124
        %2126 = vmatmul.bf16.gmra.mxu0 %v1856
        %v2127 = vpop.f32.mrf.mxu0
        %v2128 = vadd.f32 %v2079, %v2127
        %v2129 = vpop.f32.mrf.mxu0
        %v2130 = vadd.f32 %v2081, %v2129
        %2131 = vmatmul.bf16.gmra.mxu0 %v1858
        %v2132 = vpop.f32.mrf.mxu0
        %v2133 = vadd.f32 %v2084, %v2132
        %v2134 = vpop.f32.mrf.mxu0
        %v2135 = vadd.f32 %v2086, %v2134
        %2136 = vmatmul.bf16.gmra.mxu0 %v1860
        %v2137 = vpop.f32.mrf.mxu0
        %v2138 = vadd.f32 %v2089, %v2137
        %v2139 = vpop.f32.mrf.mxu0
        %v2140 = vadd.f32 %v2091, %v2139
        %2141 = vmatmul.bf16.gmra.mxu0 %v1862
        %v2142 = vpop.f32.mrf.mxu0
        %v2143 = vadd.f32 %v2094, %v2142
        %v2144 = vpop.f32.mrf.mxu0
        %v2145 = vadd.f32 %v2096, %v2144
        %2146 = vmatmul.bf16.gmra.mxu0 %v1864
        %v2147 = vpop.f32.mrf.mxu0
        %v2148 = vadd.f32 %v2099, %v2147
        %v2149 = vpop.f32.mrf.mxu0
        %v2150 = vadd.f32 %v2101, %v2149
        %2151 = vmatmul.bf16.gmra.mxu0 %v1866
        %v2152 = vpop.f32.mrf.mxu0
        %v2153 = vadd.f32 %v2104, %v2152
        %v2154 = vpop.f32.mrf.mxu0
        %v2155 = vadd.f32 %v2106, %v2154
        %2156 = vdwg.mxu0
        %2157 = vmatpush.bf16.msra.mxu0 %v2010
        %2158 = vmatpush.bf16.msra.mxu0 %v2008
        %2159 = vmatpush.bf16.msra.mxu0 %v2006
        %2160 = vmatpush.bf16.msra.mxu0 %v2004
        %2161 = vmatpush.bf16.msra.mxu0 %v2002
        %2162 = vmatpush.bf16.msra.mxu0 %v2000
        %2163 = vmatpush.bf16.msra.mxu0 %v1998
        %2164 = vmatpush.bf16.msra.mxu0 %v1996
        %2165 = vmatmul.bf16.gmra.mxu0 %v1851
        %v2166 = vpop.f32.mrf.mxu0
        %v2167 = vadd.f32 0.0, %v2166
        %v2168 = vpop.f32.mrf.mxu0
        %v2169 = vadd.f32 0.0, %v2168
        %2170 = vmatmul.bf16.gmra.mxu0 %v1853
        %v2171 = vpop.f32.mrf.mxu0
        %v2172 = vadd.f32 0.0, %v2171
        %v2173 = vpop.f32.mrf.mxu0
        %v2174 = vadd.f32 0.0, %v2173
        %2175 = vmatmul.bf16.gmra.mxu0 %v1855
        %v2176 = vpop.f32.mrf.mxu0
        %v2177 = vadd.f32 0.0, %v2176
        %v2178 = vpop.f32.mrf.mxu0
        %v2179 = vadd.f32 0.0, %v2178
        %2180 = vmatmul.bf16.gmra.mxu0 %v1857
        %v2181 = vpop.f32.mrf.mxu0
        %v2182 = vadd.f32 0.0, %v2181
        %v2183 = vpop.f32.mrf.mxu0
        %v2184 = vadd.f32 0.0, %v2183
        %2185 = vmatmul.bf16.gmra.mxu0 %v1859
        %v2186 = vpop.f32.mrf.mxu0
        %v2187 = vadd.f32 0.0, %v2186
        %v2188 = vpop.f32.mrf.mxu0
        %v2189 = vadd.f32 0.0, %v2188
        %2190 = vmatmul.bf16.gmra.mxu0 %v1861
        %v2191 = vpop.f32.mrf.mxu0
        %v2192 = vadd.f32 0.0, %v2191
        %v2193 = vpop.f32.mrf.mxu0
        %v2194 = vadd.f32 0.0, %v2193
        %2195 = vmatmul.bf16.gmra.mxu0 %v1863
        %v2196 = vpop.f32.mrf.mxu0
        %v2197 = vadd.f32 0.0, %v2196
        %v2198 = vpop.f32.mrf.mxu0
        %v2199 = vadd.f32 0.0, %v2198
        %2200 = vmatmul.bf16.gmra.mxu0 %v1865
        %v2201 = vpop.f32.mrf.mxu0
        %v2202 = vadd.f32 0.0, %v2201
        %v2203 = vpop.f32.mrf.mxu0
        %v2204 = vadd.f32 0.0, %v2203
        %2205 = vdwg.mxu0
        %2206 = vmatpush.bf16.msra.mxu0 %v2026
        %2207 = vmatpush.bf16.msra.mxu0 %v2024
        %2208 = vmatpush.bf16.msra.mxu0 %v2022
        %2209 = vmatpush.bf16.msra.mxu0 %v2020
        %2210 = vmatpush.bf16.msra.mxu0 %v2018
        %2211 = vmatpush.bf16.msra.mxu0 %v2016
        %2212 = vmatpush.bf16.msra.mxu0 %v2014
        %2213 = vmatpush.bf16.msra.mxu0 %v2012
        %2214 = vmatmul.bf16.gmra.mxu0 %v1852
        %v2215 = vpop.f32.mrf.mxu0
        %v2216 = vadd.f32 %v2167, %v2215
        %v2217 = vpop.f32.mrf.mxu0
        %v2218 = vadd.f32 %v2169, %v2217
        %2219 = vmatmul.bf16.gmra.mxu0 %v1854
        %v2220 = vpop.f32.mrf.mxu0
        %v2221 = vadd.f32 %v2172, %v2220
        %v2222 = vpop.f32.mrf.mxu0
        %v2223 = vadd.f32 %v2174, %v2222
        %2224 = vmatmul.bf16.gmra.mxu0 %v1856
        %v2225 = vpop.f32.mrf.mxu0
        %v2226 = vadd.f32 %v2177, %v2225
        %v2227 = vpop.f32.mrf.mxu0
        %v2228 = vadd.f32 %v2179, %v2227
        %2229 = vmatmul.bf16.gmra.mxu0 %v1858
        %v2230 = vpop.f32.mrf.mxu0
        %v2231 = vadd.f32 %v2182, %v2230
        %v2232 = vpop.f32.mrf.mxu0
        %v2233 = vadd.f32 %v2184, %v2232
        %2234 = vmatmul.bf16.gmra.mxu0 %v1860
        %v2235 = vpop.f32.mrf.mxu0
        %v2236 = vadd.f32 %v2187, %v2235
        %v2237 = vpop.f32.mrf.mxu0
        %v2238 = vadd.f32 %v2189, %v2237
        %2239 = vmatmul.bf16.gmra.mxu0 %v1862
        %v2240 = vpop.f32.mrf.mxu0
        %v2241 = vadd.f32 %v2192, %v2240
        %v2242 = vpop.f32.mrf.mxu0
        %v2243 = vadd.f32 %v2194, %v2242
        %2244 = vmatmul.bf16.gmra.mxu0 %v1864
        %v2245 = vpop.f32.mrf.mxu0
        %v2246 = vadd.f32 %v2197, %v2245
        %v2247 = vpop.f32.mrf.mxu0
        %v2248 = vadd.f32 %v2199, %v2247
        %2249 = vmatmul.bf16.gmra.mxu0 %v1866
        %v2250 = vpop.f32.mrf.mxu0
        %v2251 = vadd.f32 %v2202, %v2250
        %v2252 = vpop.f32.mrf.mxu0
        %v2253 = vadd.f32 %v2204, %v2252
        %2254 = vdwg.mxu0
        %v2255 = vadd.f32 %v1819, %v2118
        %v2256 = vadd.f32 %v1820, %v2216
        %v2257 = vadd.f32 %v1821, %v2120
        %v2258 = vadd.f32 %v1822, %v2218
        %v2259 = vadd.f32 %v1823, %v2123
        %v2260 = vadd.f32 %v1824, %v2221
        %v2261 = vadd.f32 %v1825, %v2125
        %v2262 = vadd.f32 %v1826, %v2223
        %v2263 = vadd.f32 %v1827, %v2128
        %v2264 = vadd.f32 %v1828, %v2226
        %v2265 = vadd.f32 %v1829, %v2130
        %v2266 = vadd.f32 %v1830, %v2228
        %v2267 = vadd.f32 %v1831, %v2133
        %v2268 = vadd.f32 %v1832, %v2231
        %v2269 = vadd.f32 %v1833, %v2135
        %v2270 = vadd.f32 %v1834, %v2233
        %v2271 = vadd.f32 %v1835, %v2138
        %v2272 = vadd.f32 %v1836, %v2236
        %v2273 = vadd.f32 %v1837, %v2140
        %v2274 = vadd.f32 %v1838, %v2238
        %v2275 = vadd.f32 %v1839, %v2143
        %v2276 = vadd.f32 %v1840, %v2241
        %v2277 = vadd.f32 %v1841, %v2145
        %v2278 = vadd.f32 %v1842, %v2243
        %v2279 = vadd.f32 %v1843, %v2148
        %v2280 = vadd.f32 %v1844, %v2246
        %v2281 = vadd.f32 %v1845, %v2150
        %v2282 = vadd.f32 %v1846, %v2248
        %v2283 = vadd.f32 %v1847, %v2153
        %v2284 = vadd.f32 %v1848, %v2251
        %v2285 = vadd.f32 %v1849, %v2155
        %v2286 = vadd.f32 %v1850, %v2253
        %2287 = vst [vmem:[#allocation2] sm:$0xff] %v2255
        %2288 = vst [vmem:[#allocation2 + $0x8] sm:$0xff] %v2256
        %2289 = vst [vmem:[#allocation2 + $0x10] sm:$0xff] %v2257
        %2290 = vst [vmem:[#allocation2 + $0x18] sm:$0xff] %v2258
        %2291 = vst [vmem:[#allocation2 + $0x20] sm:$0xff] %v2259
        %2292 = vst [vmem:[#allocation2 + $0x28] sm:$0xff] %v2260
        %2293 = vst [vmem:[#allocation2 + $0x30] sm:$0xff] %v2261
        %2294 = vst [vmem:[#allocation2 + $0x38] sm:$0xff] %v2262
        %2295 = vst [vmem:[#allocation2 + $0x40] sm:$0xff] %v2263
        %2296 = vst [vmem:[#allocation2 + $0x48] sm:$0xff] %v2264
        %2297 = vst [vmem:[#allocation2 + $0x50] sm:$0xff] %v2265
        %2298 = vst [vmem:[#allocation2 + $0x58] sm:$0xff] %v2266
        %2299 = vst [vmem:[#allocation2 + $0x60] sm:$0xff] %v2267
        %2300 = vst [vmem:[#allocation2 + $0x68] sm:$0xff] %v2268
        %2301 = vst [vmem:[#allocation2 + $0x70] sm:$0xff] %v2269
        %2302 = vst [vmem:[#allocation2 + $0x78] sm:$0xff] %v2270
        %2303 = vst [vmem:[#allocation2 + $0x80] sm:$0xff] %v2271
        %2304 = vst [vmem:[#allocation2 + $0x88] sm:$0xff] %v2272
        %2305 = vst [vmem:[#allocation2 + $0x90] sm:$0xff] %v2273
        %2306 = vst [vmem:[#allocation2 + $0x98] sm:$0xff] %v2274
        %2307 = vst [vmem:[#allocation2 + $0xa0] sm:$0xff] %v2275
        %2308 = vst [vmem:[#allocation2 + $0xa8] sm:$0xff] %v2276
        %2309 = vst [vmem:[#allocation2 + $0xb0] sm:$0xff] %v2277
        %2310 = vst [vmem:[#allocation2 + $0xb8] sm:$0xff] %v2278
        %2311 = vst [vmem:[#allocation2 + $0xc0] sm:$0xff] %v2279
        %2312 = vst [vmem:[#allocation2 + $0xc8] sm:$0xff] %v2280
        %2313 = vst [vmem:[#allocation2 + $0xd0] sm:$0xff] %v2281
        %2314 = vst [vmem:[#allocation2 + $0xd8] sm:$0xff] %v2282
        %2315 = vst [vmem:[#allocation2 + $0xe0] sm:$0xff] %v2283
        %2316 = vst [vmem:[#allocation2 + $0xe8] sm:$0xff] %v2284
        %2317 = vst [vmem:[#allocation2 + $0xf0] sm:$0xff] %v2285
        %2318 = vst [vmem:[#allocation2 + $0xf8] sm:$0xff] %v2286
        %p2319 = scmp.eq.s32.totalorder %s28, 1
        // Predicated region
        $region49: #{tpu_custom_call.1} parent=31 // pred_check
          %p2320 = pneg %p2319
        $region50: #{tpu_custom_call.1} parent=31 // pred_check_branch
          %2322 = sbr.rel (%p2320) target = $region52
        $region51: #{tpu_custom_call.1} parent=31 // pred_region
          %v2323 = vld [vmem:[#allocation2] sm:$0xff]
          %v2324 = vld [vmem:[#allocation2 + $0x8] sm:$0xff]
          %v2325 = vld [vmem:[#allocation2 + $0x10] sm:$0xff]
          %v2326 = vld [vmem:[#allocation2 + $0x18] sm:$0xff]
          %v2327 = vld [vmem:[#allocation2 + $0x20] sm:$0xff]
          %v2328 = vld [vmem:[#allocation2 + $0x28] sm:$0xff]
          %v2329 = vld [vmem:[#allocation2 + $0x30] sm:$0xff]
          %v2330 = vld [vmem:[#allocation2 + $0x38] sm:$0xff]
          %v2331 = vld [vmem:[#allocation2 + $0x40] sm:$0xff]
          %v2332 = vld [vmem:[#allocation2 + $0x48] sm:$0xff]
          %v2333 = vld [vmem:[#allocation2 + $0x50] sm:$0xff]
          %v2334 = vld [vmem:[#allocation2 + $0x58] sm:$0xff]
          %v2335 = vld [vmem:[#allocation2 + $0x60] sm:$0xff]
          %v2336 = vld [vmem:[#allocation2 + $0x68] sm:$0xff]
          %v2337 = vld [vmem:[#allocation2 + $0x70] sm:$0xff]
          %v2338 = vld [vmem:[#allocation2 + $0x78] sm:$0xff]
          %v2339 = vld [vmem:[#allocation2 + $0x80] sm:$0xff]
          %v2340 = vld [vmem:[#allocation2 + $0x88] sm:$0xff]
          %v2341 = vld [vmem:[#allocation2 + $0x90] sm:$0xff]
          %v2342 = vld [vmem:[#allocation2 + $0x98] sm:$0xff]
          %v2343 = vld [vmem:[#allocation2 + $0xa0] sm:$0xff]
          %v2344 = vld [vmem:[#allocation2 + $0xa8] sm:$0xff]
          %v2345 = vld [vmem:[#allocation2 + $0xb0] sm:$0xff]
          %v2346 = vld [vmem:[#allocation2 + $0xb8] sm:$0xff]
          %v2347 = vld [vmem:[#allocation2 + $0xc0] sm:$0xff]
          %v2348 = vld [vmem:[#allocation2 + $0xc8] sm:$0xff]
          %v2349 = vld [vmem:[#allocation2 + $0xd0] sm:$0xff]
          %v2350 = vld [vmem:[#allocation2 + $0xd8] sm:$0xff]
          %v2351 = vld [vmem:[#allocation2 + $0xe0] sm:$0xff]
          %v2352 = vld [vmem:[#allocation2 + $0xe8] sm:$0xff]
          %v2353 = vld [vmem:[#allocation2 + $0xf0] sm:$0xff]
          %v2354 = vld [vmem:[#allocation2 + $0xf8] sm:$0xff]
          %2355 = vst [vmem:[%s284] sm:$0xff] %v2323
          %2356 = vst [vmem:[%s284 + $0x8] sm:$0xff] %v2324
          %2357 = vst [vmem:[%s284 + $0x10] sm:$0xff] %v2325
          %2358 = vst [vmem:[%s284 + $0x18] sm:$0xff] %v2326
          %2359 = vst [vmem:[%s284 + $0x20] sm:$0xff] %v2327
          %2360 = vst [vmem:[%s284 + $0x28] sm:$0xff] %v2328
          %2361 = vst [vmem:[%s284 + $0x30] sm:$0xff] %v2329
          %2362 = vst [vmem:[%s284 + $0x38] sm:$0xff] %v2330
          %2363 = vst [vmem:[%s284 + $0x40] sm:$0xff] %v2331
          %2364 = vst [vmem:[%s284 + $0x48] sm:$0xff] %v2332
          %2365 = vst [vmem:[%s284 + $0x50] sm:$0xff] %v2333
          %2366 = vst [vmem:[%s284 + $0x58] sm:$0xff] %v2334
          %2367 = vst [vmem:[%s284 + $0x60] sm:$0xff] %v2335
          %2368 = vst [vmem:[%s284 + $0x68] sm:$0xff] %v2336
          %2369 = vst [vmem:[%s284 + $0x70] sm:$0xff] %v2337
          %2370 = vst [vmem:[%s284 + $0x78] sm:$0xff] %v2338
          %2371 = vst [vmem:[%s284 + $0x80] sm:$0xff] %v2339
          %2372 = vst [vmem:[%s284 + $0x88] sm:$0xff] %v2340
          %2373 = vst [vmem:[%s284 + $0x90] sm:$0xff] %v2341
          %2374 = vst [vmem:[%s284 + $0x98] sm:$0xff] %v2342
          %2375 = vst [vmem:[%s284 + $0xa0] sm:$0xff] %v2343
          %2376 = vst [vmem:[%s284 + $0xa8] sm:$0xff] %v2344
          %2377 = vst [vmem:[%s284 + $0xb0] sm:$0xff] %v2345
          %2378 = vst [vmem:[%s284 + $0xb8] sm:$0xff] %v2346
          %2379 = vst [vmem:[%s284 + $0xc0] sm:$0xff] %v2347
          %2380 = vst [vmem:[%s284 + $0xc8] sm:$0xff] %v2348
          %2381 = vst [vmem:[%s284 + $0xd0] sm:$0xff] %v2349
          %2382 = vst [vmem:[%s284 + $0xd8] sm:$0xff] %v2350
          %2383 = vst [vmem:[%s284 + $0xe0] sm:$0xff] %v2351
          %2384 = vst [vmem:[%s284 + $0xe8] sm:$0xff] %v2352
          %2385 = vst [vmem:[%s284 + $0xf0] sm:$0xff] %v2353
          %2386 = vst [vmem:[%s284 + $0xf8] sm:$0xff] %v2354
        $region52: #{tpu_custom_call.1} parent=31 // pred_fallthru
          _
        %s2387 = sand.u32 %s121, 1
        %s2388 = scalar_lea.sflag [#allocation5], %s2387
        %s2389 = sand.u32 %s121, 1
        %s2390 = smul.addr %s2389, 256
        %s2391 = scalar_lea.vmem [#allocation9], %s2390
        // Predicated region
        $region53: #{tpu_custom_call.1} parent=31 // pred_check
          %p2392 = pneg %p131
        $region54: #{tpu_custom_call.1} parent=31 // pred_check_branch
          %2394 = sbr.rel (%p2392) target = $region56
        $region55: #{tpu_custom_call.1} parent=31 // pred_region
          %s2395 = smul.u32 16, %s27
          %2397 = vsyncadd %s2388, 0
          %s2398 = smul.addr %s2395, 2
          %s2399 = smul.addr %s2398, 8
          %s2400 = scalar_lea.hbm %s3, %s2399
          %s2401 = sshll.u32 %s2391, 4
          %s2402 = int_to_ptr.vmem [resolvable:$true] %s2401
          %s2403 = sshll.u32 %s2400, 4
          %s2404 = int_to_ptr.hbm [resolvable:$true] %s2403
          %2409 = dma.vmem_to_hbm [thread:$0]  %s2402, 4096, %s2404, %s2388, 256, 256, 16
        $region56: #{tpu_custom_call.1} parent=31 // pred_fallthru
          _
      $region32: #{tpu_custom_call.1} parent=5 // pred_fallthru
        _
      %p2410 = scmp.le.s32.totalorder 2, %s18
      // Predicated region
      $region57: #{tpu_custom_call.1} parent=5 // pred_check
        %p2411 = pneg %p2410
      $region58: #{tpu_custom_call.1} parent=5 // pred_check_branch
        %2413 = sbr.rel (%p2411) target = $region60
      $region59: #{tpu_custom_call.1} parent=5 // pred_region
        %s2414 = ssub.s32 %s18, 2
        // Predicated region
        $region61: #{tpu_custom_call.1} parent=59 // pred_check
          %p2415 = pneg %p137
        $region62: #{tpu_custom_call.1} parent=59 // pred_check_branch
          %2417 = sbr.rel (%p2415) target = $region64
        $region63: #{tpu_custom_call.1} parent=59 // pred_region
          %s2418 = sand.u32 %s122, 1
          %s2419 = scalar_lea.sflag [#allocation5], %s2418
          %s2420 = sand.u32 %s122, 1
          %s2421 = smul.addr %s2420, 256
          %s2422 = scalar_lea.vmem [#allocation9], %s2421
          %2424 = dma.done %s2419, 4096
        $region64: #{tpu_custom_call.1} parent=59 // pred_fallthru
          _
      $region60: #{tpu_custom_call.1} parent=5 // pred_fallthru
        _
    $region6: #{tpu_custom_call.1} parent=1 // loop_footer
      %s22 = sadd.s32 1, %s18
    $region7: #{tpu_custom_call.1} parent=1 // loop_footer_branch
      %17 = sbr.rel target = $region3
    $region8: #{tpu_custom_call.1} parent=1 // loop_exit
      _
    %2425 = vsyncpa [#allocation4], 1
    %s2426 = scalar_lea.sflag [#allocation4], 1
    %2427 = vsyncpa %s2426, 1
    %2428 = vsyncpa [#allocation7], 1
    %s2429 = scalar_lea.sflag [#allocation7], 1
    %2430 = vsyncpa %s2429, 1
    %2431 = vsyncpa [#allocation5], 1
    %s2432 = scalar_lea.sflag [#allocation5], 1
    %2433 = vsyncpa %s2432, 1

</llo_original>
